<compile_context>
chip_gen: v7x
topology: tpu7x:2x2x1
jax: 0.10.0
libtpu: 0.0.40
codegen_flags: <defaults>
</compile_context>

<pallas_src>
import functools

import jax
import jax.numpy as jnp
from jax.experimental import pallas as pl
from jax.experimental.pallas import tpu as pltpu


# --------------------------- in-kernel im2col (VMEM) ------------------------ #

def _im2col_rows(x, w_masks, W):
    """3x3/SAME im2col on a channels-major activation, entirely in VMEM.

    x       : (Cin, H*W) f32, spatial flattened on the lane axis
    w_masks : (mask_l, None, mask_r) — (1, H*W) f32 column-validity masks, indexed by dj
    returns : (9*Cin, H*W) bf16 patch matrix, rows tap-major (k = 3*di + dj), channel-minor
    """
    Cin, HW = x.shape
    rows = []
    for di in range(3):
        for dj in range(3):
            s = (di - 1) * W + (dj - 1)                      # flattened source offset
            # shifted[c, i] = x[c, i + s], zero-filled past the flattened array ends
            if s > 0:
                sh = jnp.concatenate([x[:, s:], jnp.zeros((Cin, s), x.dtype)], axis=1)
            elif s < 0:
                sh = jnp.concatenate([jnp.zeros((Cin, -s), x.dtype), x[:, :s]], axis=1)
            else:
                sh = x
            # Row (h) out-of-image sources are already covered by the zero-fill above
            # (the two corner leftovers are simultaneously column-invalid), so only a
            # column (w) mask is needed, and only for dj != 1.
            m = w_masks[dj]
            if m is not None:
                sh = sh * m                                  # (1,HW) broadcast over Cin
            rows.append(sh)
    # aligned sublane concat (Cin is a multiple of 8) -> cheap vreg stacking
    return jnp.concatenate(rows, axis=0).astype(jnp.bfloat16)


# ------------------------------- fused kernel ------------------------------- #

def _cnn_fused_kernel(x_ref, ws_ref, bs_ref, w2a_ref, b2a_ref, w2b_ref, b2b_ref,
                      hwr_ref, hwe_ref, hb_ref, o_ref, *, H, W, c_res):
    HW = H * W
    x = x_ref[0]                                             # (c_pad, H*W) f32

    # column-validity masks, computed once and shared by all three convs
    ww = jax.lax.broadcasted_iota(jnp.int32, (1, HW), 1) % W
    mask_l = (ww > 0).astype(jnp.float32)                    # source column w-1 in-image
    mask_r = (ww < W - 1).astype(jnp.float32)                # source column w+1 in-image
    w_masks = (mask_l, None, mask_r)

    # fused stems (ResNet conv1 ++ EfficientNet stem along Cout): ONE bf16 MXU matmul
    px = _im2col_rows(x, w_masks, W)                         # (9*c_pad, HW) bf16
    stem = jnp.maximum(
        jnp.dot(ws_ref[...], px, preferred_element_type=jnp.float32) + bs_ref[...], 0.0)
    h1 = stem[:c_res]                                        # ResNet stem output
    e1 = stem[c_res:]                                        # EfficientNet features

    # ResNet-mini residual block: two more single-matmul convs
    p1 = _im2col_rows(h1, w_masks, W)                        # (9*c_res, HW) bf16
    h2 = jnp.maximum(
        jnp.dot(w2a_ref[...], p1, preferred_element_type=jnp.float32) + b2a_ref[...], 0.0)
    p2 = _im2col_rows(h2, w_masks, W)
    h3 = jnp.maximum(
        jnp.dot(w2b_ref[...], p2, preferred_element_type=jnp.float32)
        + b2b_ref[...] + h1, 0.0)

    # GAP + resnet.fc + concat + final fc: all linear, pre-folded on the host into
    # per-channel head weights (hwr, hwe include the 1/HW and resnet.fc factors) + bias
    r_sum = jnp.sum(h3, axis=1, keepdims=True)               # (c_res, 1) lane reduce (XLU)
    e_sum = jnp.sum(e1, axis=1, keepdims=True)               # (c_eff, 1)
    out = (jnp.sum(r_sum * hwr_ref[...], axis=0, keepdims=True)
           + jnp.sum(e_sum * hwe_ref[...], axis=0, keepdims=True)
           + hb_ref[...])                                    # (1, 1)

    # lane-dense store; the wrapper slices column 0
    o_ref[0] = jnp.broadcast_to(out, o_ref.shape[1:]).astype(o_ref.dtype)


# ------------------------------- model glue -------------------------------- #

def _conv_w_to_mxu(w_hwio, cin_pad=None):
    """(3,3,Cin,Cout) conv weight -> (Cout, 9*Cin) MXU slab (tap-major, channel-minor)."""
    kh, kw, cin, cout = w_hwio.shape
    if cin_pad is not None and cin_pad > cin:
        w_hwio = jnp.pad(w_hwio, ((0, 0), (0, 0), (0, cin_pad - cin), (0, 0)))
        cin = cin_pad
    return (w_hwio.reshape(kh * kw, cin, cout)
            .transpose(2, 0, 1).reshape(cout, kh * kw * cin))


def init_params(key, c_in=3, c_res=16, c_eff=32):
    ks = jax.random.split(key, 6)

    def he(k, fan_in, shape):
        return jax.random.normal(k, shape, jnp.float32) * jnp.sqrt(2.0 / fan_in)

    p = {}
    # resnet-mini branch: stem conv + one residual block + GAP + Linear(c_res, 1)
    p["rw1"] = he(ks[0], 9 * c_in, (3, 3, c_in, c_res));    p["rb1"] = jnp.zeros((c_res,), jnp.float32)
    p["rw2a"] = he(ks[1], 9 * c_res, (3, 3, c_res, c_res)); p["rb2a"] = jnp.zeros((c_res,), jnp.float32)
    p["rw2b"] = he(ks[2], 9 * c_res, (3, 3, c_res, c_res)); p["rb2b"] = jnp.zeros((c_res,), jnp.float32)
    # resnet.fc: nn.init.normal_(w, 0, 0.01); zeros_(b)  -> Linear(num_features_resnet, 1)
    p["rfc_w"] = jax.random.normal(ks[3], (c_res, 1), jnp.float32) * 0.01
    p["rfc_b"] = jnp.zeros((1,), jnp.float32)
    # efficientnet-mini branch: stem conv + GAP, classifier = Identity
    p["ew1"] = he(ks[4], 9 * c_in, (3, 3, c_in, c_eff));    p["eb1"] = jnp.zeros((c_eff,), jnp.float32)
    # final fc over concat([resnet_out(B,1), eff_features(B,c_eff)], dim=1)
    p["fc_w"] = jax.random.normal(ks[5], (1 + c_eff, 1), jnp.float32) * 0.02
    p["fc_b"] = jnp.zeros((1,), jnp.float32)
    return p


_OUT_LANES = 128  # lane-dense output slab (scalar prediction broadcast across it)


@jax.jit
def cnn_model_forward(params, spectrogram_nchw):
    p = params
    B, c_in, H, W = spectrogram_nchw.shape
    HW = H * W
    c_res = p["rb1"].shape[0]
    c_eff = p["eb1"].shape[0]
    c_stem = c_res + c_eff
    c_pad = -(-c_in // 8) * 8            # pad input channels to a sublane multiple

    # channels-major activation, spatial flattened onto the lane axis, padded channels
    x = spectrogram_nchw.astype(jnp.float32).reshape(B, c_in, HW)
    x = jnp.pad(x, ((0, 0), (0, c_pad - c_in), (0, 0)))

    # conv weights as (Cout, 9*Cin) bf16 MXU slabs; the two stems fused along Cout
    w_stem = _conv_w_to_mxu(jnp.concatenate([p["rw1"], p["ew1"]], axis=3),
                            cin_pad=c_pad).astype(jnp.bfloat16)
    b_stem = jnp.concatenate([p["rb1"], p["eb1"]]).reshape(c_stem, 1)
    w2a = _conv_w_to_mxu(p["rw2a"]).astype(jnp.bfloat16)
    b2a = p["rb2a"].reshape(c_res, 1)
    w2b = _conv_w_to_mxu(p["rw2b"]).astype(jnp.bfloat16)
    b2b = p["rb2b"].reshape(c_res, 1)

    # GAP (1/HW), resnet.fc, the concat and the final fc are all linear -> fold on host:
    #   out = Σ_c (fc_w[0]*rfc_w[c]/HW)·Σ_hw h3[c]  +  Σ_c (fc_w[1+c]/HW)·Σ_hw e1[c]
    #         + (fc_b + fc_w[0]*rfc_b)
    hwr = (p["fc_w"][:1] * p["rfc_w"]) / float(HW)            # (c_res, 1)
    hwe = p["fc_w"][1:] / float(HW)                           # (c_eff, 1)
    hb = (p["fc_b"] + p["fc_w"][0, 0] * p["rfc_b"]).reshape(1, 1)

    kernel = functools.partial(_cnn_fused_kernel, H=H, W=W, c_res=c_res)

    out = pl.pallas_call(
        kernel,
        grid=(B,),                                            # 2 steps -> both v7x TCs usable
        in_specs=[
            pl.BlockSpec((1, c_pad, HW), lambda b: (b, 0, 0)),           # x (per image)
            pl.BlockSpec((c_stem, 9 * c_pad), lambda b: (0, 0)),         # fused stem weights
            pl.BlockSpec((c_stem, 1), lambda b: (0, 0)),                 # fused stem bias
            pl.BlockSpec((c_res, 9 * c_res), lambda b: (0, 0)),          # conv2a weights
            pl.BlockSpec((c_res, 1), lambda b: (0, 0)),                  # conv2a bias
            pl.BlockSpec((c_res, 9 * c_res), lambda b: (0, 0)),          # conv2b weights
            pl.BlockSpec((c_res, 1), lambda b: (0, 0)),                  # conv2b bias
            pl.BlockSpec((c_res, 1), lambda b: (0, 0)),                  # folded head w (resnet)
            pl.BlockSpec((c_eff, 1), lambda b: (0, 0)),                  # folded head w (effnet)
            pl.BlockSpec((1, 1), lambda b: (0, 0)),                      # folded head bias
        ],
        out_specs=pl.BlockSpec((1, 1, _OUT_LANES), lambda b: (b, 0, 0)),
        out_shape=jax.ShapeDtypeStruct((B, 1, _OUT_LANES), jnp.float32),
        compiler_params=pltpu.CompilerParams(
            dimension_semantics=("parallel",),
            vmem_limit_bytes=32 * 1024 * 1024,                # explicit budget (safe on v7x 64 MiB)
        ),
    )(x, w_stem, b_stem, w2a, b2a, w2b, b2b, hwr, hwe, hb)

    return out[:, 0, :1]                                      # (B, 1)


# --------------------------- pure-JAX reference ----------------------------- #

def _conv3x3_ref(x_nchw, w_hwio, b):
    y = jax.lax.conv_general_dilated(
        x_nchw, w_hwio, window_strides=(1, 1), padding="SAME",
        dimension_numbers=("NCHW", "HWIO", "NCHW"),
        precision=jax.lax.Precision.HIGHEST)
    return y + b.reshape(1, -1, 1, 1)


@jax.jit
def cnn_model_forward_ref(params, spectrogram_nchw):
    p = params
    x = spectrogram_nchw.astype(jnp.float32)
    h1 = jax.nn.relu(_conv3x3_ref(x, p["rw1"], p["rb1"]))
    h2 = jax.nn.relu(_conv3x3_ref(h1, p["rw2a"], p["rb2a"]))
    h3 = jax.nn.relu(_conv3x3_ref(h2, p["rw2b"], p["rb2b"]) + h1)
    r_feat = h3.mean(axis=(2, 3))                             # (B, c_res)
    resnet_out = r_feat @ p["rfc_w"] + p["rfc_b"]             # (B, 1)
    e1 = jax.nn.relu(_conv3x3_ref(x, p["ew1"], p["eb1"]))
    eff_out = e1.mean(axis=(2, 3))                            # (B, c_eff)
    combined = jnp.concatenate([resnet_out, eff_out], axis=1)
    return combined @ p["fc_w"] + p["fc_b"]                   # (B, 1)


if __name__ == "__main__":
    key = jax.random.PRNGKey(0)
    k_param, k_input = jax.random.split(key)
    params = init_params(k_param)
    # spectrogram: batch=2, 3 channels (ResNet/EfficientNet expect RGB-like input), 16x16
    spectrogram = jax.random.normal(k_input, (2, 3, 16, 16), jnp.float32)

    out = jax.block_until_ready(cnn_model_forward(params, spectrogram))
    assert out.shape == (2, 1) and out.dtype == jnp.float32
    assert bool(jnp.all(jnp.isfinite(out)))

    # golden check vs. a pure-JAX f32 reference (bf16 MXU inputs -> loose tolerance)
    ref = jax.block_until_ready(cnn_model_forward_ref(params, spectrogram))
    assert bool(jnp.allclose(out, ref, rtol=2e-2, atol=2e-2)), (out, ref)

    print("KERNEL_OK")
</pallas_src>

<mosaic_0001>
module attributes {stable_mosaic.version = 11 : i64} {
  func.func @_cnn_fused_kernel(%arg0: i32, %arg1: memref<1x8x256xf32, #tpu.memory_space<vmem>>, %arg2: memref<48x72xbf16, #tpu.memory_space<vmem>>, %arg3: memref<48x1xf32, #tpu.memory_space<vmem>>, %arg4: memref<16x144xbf16, #tpu.memory_space<vmem>>, %arg5: memref<16x1xf32, #tpu.memory_space<vmem>>, %arg6: memref<16x144xbf16, #tpu.memory_space<vmem>>, %arg7: memref<16x1xf32, #tpu.memory_space<vmem>>, %arg8: memref<16x1xf32, #tpu.memory_space<vmem>>, %arg9: memref<32x1xf32, #tpu.memory_space<vmem>>, %arg10: memref<1x1xf32, #tpu.memory_space<vmem>>, %arg11: memref<1x1x128xf32, #tpu.memory_space<vmem>>) attributes {dimension_semantics = [#tpu.dimension_semantics<parallel>], iteration_bounds = array<i64: 2>, scalar_prefetch = 0 : i64, scratch_operands = 0 : i64, tpu.core_type = #tpu.core_type<tc>, window_params = [{transform_indices = @transform_0, window_bounds = array<i64: 1, 8, 256>}, {pipeline_mode = #tpu.pipeline_mode<synchronous>, transform_indices = @transform_1, window_bounds = array<i64: 48, 72>}, {pipeline_mode = #tpu.pipeline_mode<synchronous>, transform_indices = @transform_2, window_bounds = array<i64: 48, 1>}, {pipeline_mode = #tpu.pipeline_mode<synchronous>, transform_indices = @transform_3, window_bounds = array<i64: 16, 144>}, {pipeline_mode = #tpu.pipeline_mode<synchronous>, transform_indices = @transform_4, window_bounds = array<i64: 16, 1>}, {pipeline_mode = #tpu.pipeline_mode<synchronous>, transform_indices = @transform_5, window_bounds = array<i64: 16, 144>}, {pipeline_mode = #tpu.pipeline_mode<synchronous>, transform_indices = @transform_6, window_bounds = array<i64: 16, 1>}, {pipeline_mode = #tpu.pipeline_mode<synchronous>, transform_indices = @transform_7, window_bounds = array<i64: 16, 1>}, {pipeline_mode = #tpu.pipeline_mode<synchronous>, transform_indices = @transform_8, window_bounds = array<i64: 32, 1>}, {pipeline_mode = #tpu.pipeline_mode<synchronous>, transform_indices = @transform_9, window_bounds = array<i64: 1, 1>}, {transform_indices = @transform_10, window_bounds = array<i64: 1, 1, 128>}]} {
    %c0 = arith.constant 0 : index
    %c0_0 = arith.constant 0 : index
    %c0_1 = arith.constant 0 : index
    %0 = vector.load %arg1[%c0, %c0_0, %c0_1] : memref<1x8x256xf32, #tpu.memory_space<vmem>>, vector<1x8x256xf32>
    %1 = vector.shape_cast %0 : vector<1x8x256xf32> to vector<8x256xf32>
    %2 = tpu.iota {dimensions = array<i32: 1>} : vector<1x256xi32>
    %c16_i32 = arith.constant 16 : i32
    %c0_i32 = arith.constant 0 : i32
    %3 = arith.cmpi eq, %c16_i32, %c0_i32 : i32
    %c1_i32 = arith.constant 1 : i32
    %4 = arith.select %3, %c1_i32, %c16_i32 : i32
    %5 = vector.broadcast %4 : i32 to vector<1x256xi32>
    %6 = arith.remsi %2, %5 : vector<1x256xi32>
    %c0_i32_2 = arith.constant 0 : i32
    %7 = vector.broadcast %c0_i32_2 : i32 to vector<1x256xi32>
    %8 = arith.cmpi ne, %6, %7 : vector<1x256xi32>
    %c0_i32_3 = arith.constant 0 : i32
    %9 = vector.broadcast %c0_i32_3 : i32 to vector<1x256xi32>
    %10 = arith.cmpi slt, %6, %9 : vector<1x256xi32>
    %c0_i32_4 = arith.constant 0 : i32
    %11 = arith.cmpi slt, %4, %c0_i32_4 : i32
    %12 = vector.broadcast %11 : i1 to vector<1x256xi1>
    %13 = vector.broadcast %12 : vector<1x256xi1> to vector<1x256xi1>
    %14 = arith.xori %10, %13 : vector<1x256xi1>
    %15 = arith.andi %14, %8 : vector<1x256xi1>
    %16 = vector.broadcast %4 : i32 to vector<1x256xi32>
    %17 = arith.addi %6, %16 : vector<1x256xi32>
    %18 = arith.select %15, %17, %6 : vector<1x256xi1>, vector<1x256xi32>
    %c0_i32_5 = arith.constant 0 : i32
    %19 = vector.broadcast %c0_i32_5 : i32 to vector<1x256xi32>
    %20 = arith.cmpi sgt, %18, %19 : vector<1x256xi32>
    %21 = arith.extui %20 : vector<1x256xi1> to vector<1x256xi32>
    %22 = arith.sitofp %21 : vector<1x256xi32> to vector<1x256xf32>
    %c15_i32 = arith.constant 15 : i32
    %23 = vector.broadcast %c15_i32 : i32 to vector<1x256xi32>
    %24 = arith.cmpi slt, %18, %23 : vector<1x256xi32>
    %25 = arith.extui %24 : vector<1x256xi1> to vector<1x256xi32>
    %26 = arith.sitofp %25 : vector<1x256xi32> to vector<1x256xf32>
    %cst = arith.constant 0.000000e+00 : f32
    %27 = vector.broadcast %cst : f32 to vector<8x17xf32>
    %28 = vector.extract_strided_slice %1 {offsets = [0, 0], sizes = [8, 239], strides = [1, 1]} : vector<8x256xf32> to vector<8x239xf32>
    %29 = tpu.concatenate %27, %28 in 1 : vector<8x17xf32>, vector<8x239xf32> -> vector<8x256xf32>
    %30 = vector.broadcast %22 : vector<1x256xf32> to vector<8x256xf32>
    %31 = arith.mulf %29, %30 : vector<8x256xf32>
    %cst_6 = arith.constant 0.000000e+00 : f32
    %32 = vector.broadcast %cst_6 : f32 to vector<8x16xf32>
    %33 = vector.extract_strided_slice %1 {offsets = [0, 0], sizes = [8, 240], strides = [1, 1]} : vector<8x256xf32> to vector<8x240xf32>
    %34 = tpu.concatenate %32, %33 in 1 : vector<8x16xf32>, vector<8x240xf32> -> vector<8x256xf32>
    %cst_7 = arith.constant 0.000000e+00 : f32
    %35 = vector.broadcast %cst_7 : f32 to vector<8x15xf32>
    %36 = vector.extract_strided_slice %1 {offsets = [0, 0], sizes = [8, 241], strides = [1, 1]} : vector<8x256xf32> to vector<8x241xf32>
    %37 = tpu.concatenate %35, %36 in 1 : vector<8x15xf32>, vector<8x241xf32> -> vector<8x256xf32>
    %38 = vector.broadcast %26 : vector<1x256xf32> to vector<8x256xf32>
    %39 = arith.mulf %37, %38 : vector<8x256xf32>
    %cst_8 = arith.constant 0.000000e+00 : f32
    %40 = vector.broadcast %cst_8 : f32 to vector<8x1xf32>
    %41 = vector.extract_strided_slice %1 {offsets = [0, 0], sizes = [8, 255], strides = [1, 1]} : vector<8x256xf32> to vector<8x255xf32>
    %42 = tpu.concatenate %40, %41 in 1 : vector<8x1xf32>, vector<8x255xf32> -> vector<8x256xf32>
    %43 = vector.broadcast %22 : vector<1x256xf32> to vector<8x256xf32>
    %44 = arith.mulf %42, %43 : vector<8x256xf32>
    %45 = vector.extract_strided_slice %1 {offsets = [0, 1], sizes = [8, 255], strides = [1, 1]} : vector<8x256xf32> to vector<8x255xf32>
    %cst_9 = arith.constant 0.000000e+00 : f32
    %46 = vector.broadcast %cst_9 : f32 to vector<8x1xf32>
    %47 = tpu.concatenate %45, %46 in 1 : vector<8x255xf32>, vector<8x1xf32> -> vector<8x256xf32>
    %48 = vector.broadcast %26 : vector<1x256xf32> to vector<8x256xf32>
    %49 = arith.mulf %47, %48 : vector<8x256xf32>
    %50 = vector.extract_strided_slice %1 {offsets = [0, 15], sizes = [8, 241], strides = [1, 1]} : vector<8x256xf32> to vector<8x241xf32>
    %cst_10 = arith.constant 0.000000e+00 : f32
    %51 = vector.broadcast %cst_10 : f32 to vector<8x15xf32>
    %52 = tpu.concatenate %50, %51 in 1 : vector<8x241xf32>, vector<8x15xf32> -> vector<8x256xf32>
    %53 = vector.broadcast %22 : vector<1x256xf32> to vector<8x256xf32>
    %54 = arith.mulf %52, %53 : vector<8x256xf32>
    %55 = vector.extract_strided_slice %1 {offsets = [0, 16], sizes = [8, 240], strides = [1, 1]} : vector<8x256xf32> to vector<8x240xf32>
    %cst_11 = arith.constant 0.000000e+00 : f32
    %56 = vector.broadcast %cst_11 : f32 to vector<8x16xf32>
    %57 = tpu.concatenate %55, %56 in 1 : vector<8x240xf32>, vector<8x16xf32> -> vector<8x256xf32>
    %58 = vector.extract_strided_slice %1 {offsets = [0, 17], sizes = [8, 239], strides = [1, 1]} : vector<8x256xf32> to vector<8x239xf32>
    %cst_12 = arith.constant 0.000000e+00 : f32
    %59 = vector.broadcast %cst_12 : f32 to vector<8x17xf32>
    %60 = tpu.concatenate %58, %59 in 1 : vector<8x239xf32>, vector<8x17xf32> -> vector<8x256xf32>
    %61 = vector.broadcast %26 : vector<1x256xf32> to vector<8x256xf32>
    %62 = arith.mulf %60, %61 : vector<8x256xf32>
    %63 = tpu.concatenate %31, %34, %39, %44, %1, %49, %54, %57, %62 in 0 : vector<8x256xf32>, vector<8x256xf32>, vector<8x256xf32>, vector<8x256xf32>, vector<8x256xf32>, vector<8x256xf32>, vector<8x256xf32>, vector<8x256xf32>, vector<8x256xf32> -> vector<72x256xf32>
    %64 = arith.truncf %63 : vector<72x256xf32> to vector<72x256xbf16>
    %c0_13 = arith.constant 0 : index
    %c0_14 = arith.constant 0 : index
    %65 = vector.load %arg2[%c0_13, %c0_14] : memref<48x72xbf16, #tpu.memory_space<vmem>>, vector<48x72xbf16>
    %cst_15 = arith.constant dense<0.000000e+00> : vector<48x256xf32>
    %66 = tpu.matmul %65, %64, %cst_15 {dimension_numbers = #tpu.dot_dimension_numbers<[1], [0], [0], [1], [0, 0, 1, 1], [], []>} : vector<48x72xbf16>, vector<72x256xbf16>, vector<48x256xf32> -> vector<48x256xf32>
    %c0_16 = arith.constant 0 : index
    %c0_17 = arith.constant 0 : index
    %67 = vector.load %arg3[%c0_16, %c0_17] : memref<48x1xf32, #tpu.memory_space<vmem>>, vector<48x1xf32>
    %68 = vector.broadcast %67 : vector<48x1xf32> to vector<48x256xf32>
    %69 = arith.addf %66, %68 : vector<48x256xf32>
    %cst_18 = arith.constant 0.000000e+00 : f32
    %70 = vector.broadcast %cst_18 : f32 to vector<48x256xf32>
    %71 = arith.maximumf %69, %70 : vector<48x256xf32>
    %72 = vector.extract_strided_slice %71 {offsets = [0, 0], sizes = [16, 256], strides = [1, 1]} : vector<48x256xf32> to vector<16x256xf32>
    %73 = vector.extract_strided_slice %71 {offsets = [16, 0], sizes = [32, 256], strides = [1, 1]} : vector<48x256xf32> to vector<32x256xf32>
    %cst_19 = arith.constant 0.000000e+00 : f32
    %74 = vector.broadcast %cst_19 : f32 to vector<16x17xf32>
    %75 = vector.extract_strided_slice %72 {offsets = [0, 0], sizes = [16, 239], strides = [1, 1]} : vector<16x256xf32> to vector<16x239xf32>
    %76 = tpu.concatenate %74, %75 in 1 : vector<16x17xf32>, vector<16x239xf32> -> vector<16x256xf32>
    %77 = vector.broadcast %22 : vector<1x256xf32> to vector<16x256xf32>
    %78 = arith.mulf %76, %77 : vector<16x256xf32>
    %cst_20 = arith.constant 0.000000e+00 : f32
    %79 = vector.broadcast %cst_20 : f32 to vector<16x16xf32>
    %80 = vector.extract_strided_slice %72 {offsets = [0, 0], sizes = [16, 240], strides = [1, 1]} : vector<16x256xf32> to vector<16x240xf32>
    %81 = tpu.concatenate %79, %80 in 1 : vector<16x16xf32>, vector<16x240xf32> -> vector<16x256xf32>
    %cst_21 = arith.constant 0.000000e+00 : f32
    %82 = vector.broadcast %cst_21 : f32 to vector<16x15xf32>
    %83 = vector.extract_strided_slice %72 {offsets = [0, 0], sizes = [16, 241], strides = [1, 1]} : vector<16x256xf32> to vector<16x241xf32>
    %84 = tpu.concatenate %82, %83 in 1 : vector<16x15xf32>, vector<16x241xf32> -> vector<16x256xf32>
    %85 = vector.broadcast %26 : vector<1x256xf32> to vector<16x256xf32>
    %86 = arith.mulf %84, %85 : vector<16x256xf32>
    %cst_22 = arith.constant 0.000000e+00 : f32
    %87 = vector.broadcast %cst_22 : f32 to vector<16x1xf32>
    %88 = vector.extract_strided_slice %72 {offsets = [0, 0], sizes = [16, 255], strides = [1, 1]} : vector<16x256xf32> to vector<16x255xf32>
    %89 = tpu.concatenate %87, %88 in 1 : vector<16x1xf32>, vector<16x255xf32> -> vector<16x256xf32>
    %90 = vector.broadcast %22 : vector<1x256xf32> to vector<16x256xf32>
    %91 = arith.mulf %89, %90 : vector<16x256xf32>
    %92 = vector.extract_strided_slice %72 {offsets = [0, 1], sizes = [16, 255], strides = [1, 1]} : vector<16x256xf32> to vector<16x255xf32>
    %cst_23 = arith.constant 0.000000e+00 : f32
    %93 = vector.broadcast %cst_23 : f32 to vector<16x1xf32>
    %94 = tpu.concatenate %92, %93 in 1 : vector<16x255xf32>, vector<16x1xf32> -> vector<16x256xf32>
    %95 = vector.broadcast %26 : vector<1x256xf32> to vector<16x256xf32>
    %96 = arith.mulf %94, %95 : vector<16x256xf32>
    %97 = vector.extract_strided_slice %72 {offsets = [0, 15], sizes = [16, 241], strides = [1, 1]} : vector<16x256xf32> to vector<16x241xf32>
    %cst_24 = arith.constant 0.000000e+00 : f32
    %98 = vector.broadcast %cst_24 : f32 to vector<16x15xf32>
    %99 = tpu.concatenate %97, %98 in 1 : vector<16x241xf32>, vector<16x15xf32> -> vector<16x256xf32>
    %100 = vector.broadcast %22 : vector<1x256xf32> to vector<16x256xf32>
    %101 = arith.mulf %99, %100 : vector<16x256xf32>
    %102 = vector.extract_strided_slice %72 {offsets = [0, 16], sizes = [16, 240], strides = [1, 1]} : vector<16x256xf32> to vector<16x240xf32>
    %cst_25 = arith.constant 0.000000e+00 : f32
    %103 = vector.broadcast %cst_25 : f32 to vector<16x16xf32>
    %104 = tpu.concatenate %102, %103 in 1 : vector<16x240xf32>, vector<16x16xf32> -> vector<16x256xf32>
    %105 = vector.extract_strided_slice %72 {offsets = [0, 17], sizes = [16, 239], strides = [1, 1]} : vector<16x256xf32> to vector<16x239xf32>
    %cst_26 = arith.constant 0.000000e+00 : f32
    %106 = vector.broadcast %cst_26 : f32 to vector<16x17xf32>
    %107 = tpu.concatenate %105, %106 in 1 : vector<16x239xf32>, vector<16x17xf32> -> vector<16x256xf32>
    %108 = vector.broadcast %26 : vector<1x256xf32> to vector<16x256xf32>
    %109 = arith.mulf %107, %108 : vector<16x256xf32>
    %110 = tpu.concatenate %78, %81, %86, %91, %72, %96, %101, %104, %109 in 0 : vector<16x256xf32>, vector<16x256xf32>, vector<16x256xf32>, vector<16x256xf32>, vector<16x256xf32>, vector<16x256xf32>, vector<16x256xf32>, vector<16x256xf32>, vector<16x256xf32> -> vector<144x256xf32>
    %111 = arith.truncf %110 : vector<144x256xf32> to vector<144x256xbf16>
    %c0_27 = arith.constant 0 : index
    %c0_28 = arith.constant 0 : index
    %112 = vector.load %arg4[%c0_27, %c0_28] : memref<16x144xbf16, #tpu.memory_space<vmem>>, vector<16x144xbf16>
    %cst_29 = arith.constant dense<0.000000e+00> : vector<16x256xf32>
    %113 = tpu.matmul %112, %111, %cst_29 {dimension_numbers = #tpu.dot_dimension_numbers<[1], [0], [0], [1], [0, 0, 1, 1], [], []>} : vector<16x144xbf16>, vector<144x256xbf16>, vector<16x256xf32> -> vector<16x256xf32>
    %c0_30 = arith.constant 0 : index
    %c0_31 = arith.constant 0 : index
    %114 = vector.load %arg5[%c0_30, %c0_31] : memref<16x1xf32, #tpu.memory_space<vmem>>, vector<16x1xf32>
    %115 = vector.broadcast %114 : vector<16x1xf32> to vector<16x256xf32>
    %116 = arith.addf %113, %115 : vector<16x256xf32>
    %cst_32 = arith.constant 0.000000e+00 : f32
    %117 = vector.broadcast %cst_32 : f32 to vector<16x256xf32>
    %118 = arith.maximumf %116, %117 : vector<16x256xf32>
    %cst_33 = arith.constant 0.000000e+00 : f32
    %119 = vector.broadcast %cst_33 : f32 to vector<16x17xf32>
    %120 = vector.extract_strided_slice %118 {offsets = [0, 0], sizes = [16, 239], strides = [1, 1]} : vector<16x256xf32> to vector<16x239xf32>
    %121 = tpu.concatenate %119, %120 in 1 : vector<16x17xf32>, vector<16x239xf32> -> vector<16x256xf32>
    %122 = vector.broadcast %22 : vector<1x256xf32> to vector<16x256xf32>
    %123 = arith.mulf %121, %122 : vector<16x256xf32>
    %cst_34 = arith.constant 0.000000e+00 : f32
    %124 = vector.broadcast %cst_34 : f32 to vector<16x16xf32>
    %125 = vector.extract_strided_slice %118 {offsets = [0, 0], sizes = [16, 240], strides = [1, 1]} : vector<16x256xf32> to vector<16x240xf32>
    %126 = tpu.concatenate %124, %125 in 1 : vector<16x16xf32>, vector<16x240xf32> -> vector<16x256xf32>
    %cst_35 = arith.constant 0.000000e+00 : f32
    %127 = vector.broadcast %cst_35 : f32 to vector<16x15xf32>
    %128 = vector.extract_strided_slice %118 {offsets = [0, 0], sizes = [16, 241], strides = [1, 1]} : vector<16x256xf32> to vector<16x241xf32>
    %129 = tpu.concatenate %127, %128 in 1 : vector<16x15xf32>, vector<16x241xf32> -> vector<16x256xf32>
    %130 = vector.broadcast %26 : vector<1x256xf32> to vector<16x256xf32>
    %131 = arith.mulf %129, %130 : vector<16x256xf32>
    %cst_36 = arith.constant 0.000000e+00 : f32
    %132 = vector.broadcast %cst_36 : f32 to vector<16x1xf32>
    %133 = vector.extract_strided_slice %118 {offsets = [0, 0], sizes = [16, 255], strides = [1, 1]} : vector<16x256xf32> to vector<16x255xf32>
    %134 = tpu.concatenate %132, %133 in 1 : vector<16x1xf32>, vector<16x255xf32> -> vector<16x256xf32>
    %135 = vector.broadcast %22 : vector<1x256xf32> to vector<16x256xf32>
    %136 = arith.mulf %134, %135 : vector<16x256xf32>
    %137 = vector.extract_strided_slice %118 {offsets = [0, 1], sizes = [16, 255], strides = [1, 1]} : vector<16x256xf32> to vector<16x255xf32>
    %cst_37 = arith.constant 0.000000e+00 : f32
    %138 = vector.broadcast %cst_37 : f32 to vector<16x1xf32>
    %139 = tpu.concatenate %137, %138 in 1 : vector<16x255xf32>, vector<16x1xf32> -> vector<16x256xf32>
    %140 = vector.broadcast %26 : vector<1x256xf32> to vector<16x256xf32>
    %141 = arith.mulf %139, %140 : vector<16x256xf32>
    %142 = vector.extract_strided_slice %118 {offsets = [0, 15], sizes = [16, 241], strides = [1, 1]} : vector<16x256xf32> to vector<16x241xf32>
    %cst_38 = arith.constant 0.000000e+00 : f32
    %143 = vector.broadcast %cst_38 : f32 to vector<16x15xf32>
    %144 = tpu.concatenate %142, %143 in 1 : vector<16x241xf32>, vector<16x15xf32> -> vector<16x256xf32>
    %145 = vector.broadcast %22 : vector<1x256xf32> to vector<16x256xf32>
    %146 = arith.mulf %144, %145 : vector<16x256xf32>
    %147 = vector.extract_strided_slice %118 {offsets = [0, 16], sizes = [16, 240], strides = [1, 1]} : vector<16x256xf32> to vector<16x240xf32>
    %cst_39 = arith.constant 0.000000e+00 : f32
    %148 = vector.broadcast %cst_39 : f32 to vector<16x16xf32>
    %149 = tpu.concatenate %147, %148 in 1 : vector<16x240xf32>, vector<16x16xf32> -> vector<16x256xf32>
    %150 = vector.extract_strided_slice %118 {offsets = [0, 17], sizes = [16, 239], strides = [1, 1]} : vector<16x256xf32> to vector<16x239xf32>
    %cst_40 = arith.constant 0.000000e+00 : f32
    %151 = vector.broadcast %cst_40 : f32 to vector<16x17xf32>
    %152 = tpu.concatenate %150, %151 in 1 : vector<16x239xf32>, vector<16x17xf32> -> vector<16x256xf32>
    %153 = vector.broadcast %26 : vector<1x256xf32> to vector<16x256xf32>
    %154 = arith.mulf %152, %153 : vector<16x256xf32>
    %155 = tpu.concatenate %123, %126, %131, %136, %118, %141, %146, %149, %154 in 0 : vector<16x256xf32>, vector<16x256xf32>, vector<16x256xf32>, vector<16x256xf32>, vector<16x256xf32>, vector<16x256xf32>, vector<16x256xf32>, vector<16x256xf32>, vector<16x256xf32> -> vector<144x256xf32>
    %156 = arith.truncf %155 : vector<144x256xf32> to vector<144x256xbf16>
    %c0_41 = arith.constant 0 : index
    %c0_42 = arith.constant 0 : index
    %157 = vector.load %arg6[%c0_41, %c0_42] : memref<16x144xbf16, #tpu.memory_space<vmem>>, vector<16x144xbf16>
    %cst_43 = arith.constant dense<0.000000e+00> : vector<16x256xf32>
    %158 = tpu.matmul %157, %156, %cst_43 {dimension_numbers = #tpu.dot_dimension_numbers<[1], [0], [0], [1], [0, 0, 1, 1], [], []>} : vector<16x144xbf16>, vector<144x256xbf16>, vector<16x256xf32> -> vector<16x256xf32>
    %c0_44 = arith.constant 0 : index
    %c0_45 = arith.constant 0 : index
    %159 = vector.load %arg7[%c0_44, %c0_45] : memref<16x1xf32, #tpu.memory_space<vmem>>, vector<16x1xf32>
    %160 = vector.broadcast %159 : vector<16x1xf32> to vector<16x256xf32>
    %161 = arith.addf %158, %160 : vector<16x256xf32>
    %162 = arith.addf %161, %72 : vector<16x256xf32>
    %cst_46 = arith.constant 0.000000e+00 : f32
    %163 = vector.broadcast %cst_46 : f32 to vector<16x256xf32>
    %164 = arith.maximumf %162, %163 : vector<16x256xf32>
    %cst_47 = arith.constant dense<0.000000e+00> : vector<16xf32>
    %165 = vector.multi_reduction <add>, %164, %cst_47 [1] : vector<16x256xf32> to vector<16xf32>
    %166 = vector.shape_cast %165 : vector<16xf32> to vector<16x1xf32>
    %cst_48 = arith.constant dense<0.000000e+00> : vector<32xf32>
    %167 = vector.multi_reduction <add>, %73, %cst_48 [1] : vector<32x256xf32> to vector<32xf32>
    %168 = vector.shape_cast %167 : vector<32xf32> to vector<32x1xf32>
    %c0_49 = arith.constant 0 : index
    %c0_50 = arith.constant 0 : index
    %169 = vector.load %arg8[%c0_49, %c0_50] : memref<16x1xf32, #tpu.memory_space<vmem>>, vector<16x1xf32>
    %170 = arith.mulf %166, %169 : vector<16x1xf32>
    %cst_51 = arith.constant dense<0.000000e+00> : vector<1xf32>
    %171 = vector.multi_reduction <add>, %170, %cst_51 [0] : vector<16x1xf32> to vector<1xf32>
    %172 = vector.shape_cast %171 : vector<1xf32> to vector<1x1xf32>
    %c0_52 = arith.constant 0 : index
    %c0_53 = arith.constant 0 : index
    %173 = vector.load %arg9[%c0_52, %c0_53] : memref<32x1xf32, #tpu.memory_space<vmem>>, vector<32x1xf32>
    %174 = arith.mulf %168, %173 : vector<32x1xf32>
    %cst_54 = arith.constant dense<0.000000e+00> : vector<1xf32>
    %175 = vector.multi_reduction <add>, %174, %cst_54 [0] : vector<32x1xf32> to vector<1xf32>
    %176 = vector.shape_cast %175 : vector<1xf32> to vector<1x1xf32>
    %177 = arith.addf %172, %176 : vector<1x1xf32>
    %c0_55 = arith.constant 0 : index
    %c0_56 = arith.constant 0 : index
    %178 = vector.load %arg10[%c0_55, %c0_56] : memref<1x1xf32, #tpu.memory_space<vmem>>, vector<1x1xf32>
    %179 = arith.addf %177, %178 : vector<1x1xf32>
    %180 = vector.shape_cast %179 : vector<1x1xf32> to vector<1x1xf32>
    %181 = vector.broadcast %180 : vector<1x1xf32> to vector<1x128xf32>
    %c0_57 = arith.constant 0 : index
    %c0_58 = arith.constant 0 : index
    %c0_59 = arith.constant 0 : index
    %182 = vector.load %arg11[%c0_57, %c0_58, %c0_59] : memref<1x1x128xf32, #tpu.memory_space<vmem>>, vector<1x1x128xf32>
    %183 = vector.shape_cast %182 : vector<1x1x128xf32> to vector<1x128xf32>
    %184 = vector.shape_cast %181 : vector<1x128xf32> to vector<1x1x128xf32>
    tpu.vector_store %arg11[%c0_57, %c0_58, %c0_59], %184 {strides = array<i32>} : memref<1x1x128xf32, #tpu.memory_space<vmem>>, vector<1x1x128xf32>,
    return
  }
  func.func @transform_0(%arg0: i32) -> (i32, i32, i32) {
    %c0_i32 = arith.constant 0 : i32
    %c0_i32_0 = arith.constant 0 : i32
    %c0_i32_1 = arith.constant 0 : i32
    return %arg0, %c0_i32, %c0_i32_0 : i32, i32, i32
  }
  func.func @transform_1(%arg0: i32) -> (i32, i32) {
    %c0_i32 = arith.constant 0 : i32
    %c0_i32_0 = arith.constant 0 : i32
    %c0_i32_1 = arith.constant 0 : i32
    return %c0_i32, %c0_i32_0 : i32, i32
  }
  func.func @transform_2(%arg0: i32) -> (i32, i32) {
    %c0_i32 = arith.constant 0 : i32
    %c0_i32_0 = arith.constant 0 : i32
    %c0_i32_1 = arith.constant 0 : i32
    return %c0_i32, %c0_i32_0 : i32, i32
  }
  func.func @transform_3(%arg0: i32) -> (i32, i32) {
    %c0_i32 = arith.constant 0 : i32
    %c0_i32_0 = arith.constant 0 : i32
    %c0_i32_1 = arith.constant 0 : i32
    return %c0_i32, %c0_i32_0 : i32, i32
  }
  func.func @transform_4(%arg0: i32) -> (i32, i32) {
    %c0_i32 = arith.constant 0 : i32
    %c0_i32_0 = arith.constant 0 : i32
    %c0_i32_1 = arith.constant 0 : i32
    return %c0_i32, %c0_i32_0 : i32, i32
  }
  func.func @transform_5(%arg0: i32) -> (i32, i32) {
    %c0_i32 = arith.constant 0 : i32
    %c0_i32_0 = arith.constant 0 : i32
    %c0_i32_1 = arith.constant 0 : i32
    return %c0_i32, %c0_i32_0 : i32, i32
  }
  func.func @transform_6(%arg0: i32) -> (i32, i32) {
    %c0_i32 = arith.constant 0 : i32
    %c0_i32_0 = arith.constant 0 : i32
    %c0_i32_1 = arith.constant 0 : i32
    return %c0_i32, %c0_i32_0 : i32, i32
  }
  func.func @transform_7(%arg0: i32) -> (i32, i32) {
    %c0_i32 = arith.constant 0 : i32
    %c0_i32_0 = arith.constant 0 : i32
    %c0_i32_1 = arith.constant 0 : i32
    return %c0_i32, %c0_i32_0 : i32, i32
  }
  func.func @transform_8(%arg0: i32) -> (i32, i32) {
    %c0_i32 = arith.constant 0 : i32
    %c0_i32_0 = arith.constant 0 : i32
    %c0_i32_1 = arith.constant 0 : i32
    return %c0_i32, %c0_i32_0 : i32, i32
  }
  func.func @transform_9(%arg0: i32) -> (i32, i32) {
    %c0_i32 = arith.constant 0 : i32
    %c0_i32_0 = arith.constant 0 : i32
    %c0_i32_1 = arith.constant 0 : i32
    return %c0_i32, %c0_i32_0 : i32, i32
  }
  func.func @transform_10(%arg0: i32) -> (i32, i32, i32) {
    %c0_i32 = arith.constant 0 : i32
    %c0_i32_0 = arith.constant 0 : i32
    %c0_i32_1 = arith.constant 0 : i32
    return %arg0, %c0_i32, %c0_i32_0 : i32, i32, i32
  }
}

</mosaic_0001>

<llo_original>
// kernel: cnn_model_forward.1
$region0: #{cnn_model_forward.1}
  #allocation0 [shape = 'u32[]', space=smem, size = 0x4, offset = 0x4, fixed_abs, tag = 'smem constant byte address 0x4 - core index']
  #allocation1 [shape = 'u32[144,128]{1,0:T(1,128)}', space=vmem, size = 0x12000, scoped, tag = 'internal scratch']
  #allocation2 [shape = 'f32[1,1]{1,0:T(1,128)S(1)}', space=vmem, size = 0x200, scoped, tag = 'scoped memory for cnn_model_forward.1']
  %s0 = inlined_call_operand.vmem [shape: f32[2,8,256], index: 0, kind: input, shape index: {}]
  %s1 = inlined_call_operand.vmem [shape: bf16[48,72], index: 1, kind: input, shape index: {}]
  %s2 = inlined_call_operand.vmem [shape: f32[48,1], index: 2, kind: input, shape index: {}]
  %s3 = inlined_call_operand.vmem [shape: bf16[16,144], index: 3, kind: input, shape index: {}]
  %s4 = inlined_call_operand.vmem [shape: f32[16,1], index: 4, kind: input, shape index: {}]
  %s5 = inlined_call_operand.vmem [shape: bf16[16,144], index: 5, kind: input, shape index: {}]
  %s6 = inlined_call_operand.vmem [shape: f32[16,1], index: 6, kind: input, shape index: {}]
  %s7 = inlined_call_operand.vmem [shape: f32[16,1], index: 7, kind: input, shape index: {}]
  %s8 = inlined_call_operand.vmem [shape: f32[32,1], index: 8, kind: input, shape index: {}]
  %s9 = inlined_call_operand.<no memory space> [shape: f32[1,1], index: 9, kind: input, shape index: {}]
  %s10 = inlined_call_operand.vmem [shape: f32[2,1,128], index: 10, kind: output, shape index: {}]
  %s11 = sld [smem:[#allocation0]]
  $region73: #{cnn_model_forward.1} parent=0
    _
  %s13 = ssub.s32 1, %s11
  %s14 = scalar_select 0, %s13, %s11
  %v15 = vstv %s9
  %16 = vst [vmem:[#allocation2] sm:$0x1] %v15
  loop: start=0, step=1, limit=4
  $region2: #{cnn_model_forward.1} parent=0 // loop_pre_header
    _
  $region3: #{cnn_model_forward.1} parent=0 // loop_header
    %s18 = sphi 0, %s22
    %p19 = scmp.ge.s32.totalorder %s18, 4
    %s28 = sphi 0, %s30
    %s31 = sphi 0, %s28
    %s32 = sphi 0, %s31
    %s48 = sphi 0, %s32
    %s52 = sphi 0, %s52
    %s54 = sphi 0, %s52
    %s55 = sphi 0, %s54
    %s69 = sphi 0, %s55
    %s73 = sphi 0, %s73
    %s75 = sphi 0, %s73
    %s76 = sphi 0, %s75
    %s90 = sphi 0, %s76
    %s94 = sphi 0, %s94
    %s96 = sphi 0, %s94
    %s97 = sphi 0, %s96
    %s111 = sphi 0, %s97
    %s115 = sphi 0, %s115
    %s117 = sphi 0, %s115
    %s118 = sphi 0, %s117
    %s132 = sphi 0, %s118
    %s136 = sphi 0, %s136
    %s138 = sphi 0, %s136
    %s139 = sphi 0, %s138
    %s153 = sphi 0, %s139
    %s157 = sphi 0, %s157
    %s159 = sphi 0, %s157
    %s160 = sphi 0, %s159
    %s174 = sphi 0, %s160
    %s178 = sphi 0, %s178
    %s180 = sphi 0, %s178
    %s181 = sphi 0, %s180
    %s195 = sphi 0, %s181
    %s199 = sphi 0, %s199
    %s201 = sphi 0, %s199
    %s202 = sphi 0, %s201
    %s216 = sphi 0, %s202
    %s220 = sphi 0, %s220
    %s222 = sphi 0, %s220
    %s223 = sphi 0, %s222
    %s237 = sphi 0, %s223
    %s243 = sphi 0, %s245
    %s246 = sphi 0, %s243
    %s247 = sphi 0, %s246
    %s263 = sphi 0, %s247
  $region4: #{cnn_model_forward.1} parent=0 // loop_header_branch
    %21 = sbr.rel (%p19) target = $region8
  $region5: #{cnn_model_forward.1} parent=0 // loop_body
    %s23 = ssub.s32 %s18, 1
    %s24 = ssub.s32 %s18, 2
    %s25 = sadd.s32 %s18, 1
    %s26 = ssub.s32 %s18, %s25
    %p27 = scmp.eq.s32.totalorder %s26, 0
    %s29 = sadd.s32 %s28, 1
    %s30 = scalar_select %p27, %s28, %s29
    %p33 = pneg %p27
    %p34 = scmp.eq.s32.totalorder %s18, 1
    %p35 = por %p33, %p34
    %p36 = scmp.ne.s32.totalorder %s28, %s31
    %p37 = scmp.eq.s32.totalorder %s18, 0
    %p38 = por %p36, %p37
    %p39 = scmp.ne.s32.totalorder %s28, %s31
    %p40 = scmp.eq.s32.totalorder %s23, 1
    %p41 = por %p39, %p40
    %p42 = scmp.ne.s32.totalorder %s31, %s32
    %p43 = scmp.eq.s32.totalorder %s23, 0
    %p44 = por %p42, %p43
    %p45 = scmp.ne.s32.totalorder %s31, %s32
    %p46 = scmp.eq.s32.totalorder %s24, 1
    %p47 = por %p45, %p46
    %p49 = scmp.ne.s32.totalorder %s32, %s48
    %p50 = scmp.eq.s32.totalorder %s24, 0
    %p51 = por %p49, %p50
    %s53 = sadd.s32 %s52, 1
    %p56 = scmp.eq.s32.totalorder %s18, 1
    %p57 = scmp.ne.s32.totalorder %s52, %s54
    %p58 = scmp.eq.s32.totalorder %s18, 0
    %p59 = por %p57, %p58
    %p60 = scmp.ne.s32.totalorder %s52, %s54
    %p61 = scmp.eq.s32.totalorder %s23, 1
    %p62 = por %p60, %p61
    %p63 = scmp.ne.s32.totalorder %s54, %s55
    %p64 = scmp.eq.s32.totalorder %s23, 0
    %p65 = por %p63, %p64
    %p66 = scmp.ne.s32.totalorder %s54, %s55
    %p67 = scmp.eq.s32.totalorder %s24, 1
    %p68 = por %p66, %p67
    %p70 = scmp.ne.s32.totalorder %s55, %s69
    %p71 = scmp.eq.s32.totalorder %s24, 0
    %p72 = por %p70, %p71
    %s74 = sadd.s32 %s73, 1
    %p77 = scmp.eq.s32.totalorder %s18, 1
    %p78 = scmp.ne.s32.totalorder %s73, %s75
    %p79 = scmp.eq.s32.totalorder %s18, 0
    %p80 = por %p78, %p79
    %p81 = scmp.ne.s32.totalorder %s73, %s75
    %p82 = scmp.eq.s32.totalorder %s23, 1
    %p83 = por %p81, %p82
    %p84 = scmp.ne.s32.totalorder %s75, %s76
    %p85 = scmp.eq.s32.totalorder %s23, 0
    %p86 = por %p84, %p85
    %p87 = scmp.ne.s32.totalorder %s75, %s76
    %p88 = scmp.eq.s32.totalorder %s24, 1
    %p89 = por %p87, %p88
    %p91 = scmp.ne.s32.totalorder %s76, %s90
    %p92 = scmp.eq.s32.totalorder %s24, 0
    %p93 = por %p91, %p92
    %s95 = sadd.s32 %s94, 1
    %p98 = scmp.eq.s32.totalorder %s18, 1
    %p99 = scmp.ne.s32.totalorder %s94, %s96
    %p100 = scmp.eq.s32.totalorder %s18, 0
    %p101 = por %p99, %p100
    %p102 = scmp.ne.s32.totalorder %s94, %s96
    %p103 = scmp.eq.s32.totalorder %s23, 1
    %p104 = por %p102, %p103
    %p105 = scmp.ne.s32.totalorder %s96, %s97
    %p106 = scmp.eq.s32.totalorder %s23, 0
    %p107 = por %p105, %p106
    %p108 = scmp.ne.s32.totalorder %s96, %s97
    %p109 = scmp.eq.s32.totalorder %s24, 1
    %p110 = por %p108, %p109
    %p112 = scmp.ne.s32.totalorder %s97, %s111
    %p113 = scmp.eq.s32.totalorder %s24, 0
    %p114 = por %p112, %p113
    %s116 = sadd.s32 %s115, 1
    %p119 = scmp.eq.s32.totalorder %s18, 1
    %p120 = scmp.ne.s32.totalorder %s115, %s117
    %p121 = scmp.eq.s32.totalorder %s18, 0
    %p122 = por %p120, %p121
    %p123 = scmp.ne.s32.totalorder %s115, %s117
    %p124 = scmp.eq.s32.totalorder %s23, 1
    %p125 = por %p123, %p124
    %p126 = scmp.ne.s32.totalorder %s117, %s118
    %p127 = scmp.eq.s32.totalorder %s23, 0
    %p128 = por %p126, %p127
    %p129 = scmp.ne.s32.totalorder %s117, %s118
    %p130 = scmp.eq.s32.totalorder %s24, 1
    %p131 = por %p129, %p130
    %p133 = scmp.ne.s32.totalorder %s118, %s132
    %p134 = scmp.eq.s32.totalorder %s24, 0
    %p135 = por %p133, %p134
    %s137 = sadd.s32 %s136, 1
    %p140 = scmp.eq.s32.totalorder %s18, 1
    %p141 = scmp.ne.s32.totalorder %s136, %s138
    %p142 = scmp.eq.s32.totalorder %s18, 0
    %p143 = por %p141, %p142
    %p144 = scmp.ne.s32.totalorder %s136, %s138
    %p145 = scmp.eq.s32.totalorder %s23, 1
    %p146 = por %p144, %p145
    %p147 = scmp.ne.s32.totalorder %s138, %s139
    %p148 = scmp.eq.s32.totalorder %s23, 0
    %p149 = por %p147, %p148
    %p150 = scmp.ne.s32.totalorder %s138, %s139
    %p151 = scmp.eq.s32.totalorder %s24, 1
    %p152 = por %p150, %p151
    %p154 = scmp.ne.s32.totalorder %s139, %s153
    %p155 = scmp.eq.s32.totalorder %s24, 0
    %p156 = por %p154, %p155
    %s158 = sadd.s32 %s157, 1
    %p161 = scmp.eq.s32.totalorder %s18, 1
    %p162 = scmp.ne.s32.totalorder %s157, %s159
    %p163 = scmp.eq.s32.totalorder %s18, 0
    %p164 = por %p162, %p163
    %p165 = scmp.ne.s32.totalorder %s157, %s159
    %p166 = scmp.eq.s32.totalorder %s23, 1
    %p167 = por %p165, %p166
    %p168 = scmp.ne.s32.totalorder %s159, %s160
    %p169 = scmp.eq.s32.totalorder %s23, 0
    %p170 = por %p168, %p169
    %p171 = scmp.ne.s32.totalorder %s159, %s160
    %p172 = scmp.eq.s32.totalorder %s24, 1
    %p173 = por %p171, %p172
    %p175 = scmp.ne.s32.totalorder %s160, %s174
    %p176 = scmp.eq.s32.totalorder %s24, 0
    %p177 = por %p175, %p176
    %s179 = sadd.s32 %s178, 1
    %p182 = scmp.eq.s32.totalorder %s18, 1
    %p183 = scmp.ne.s32.totalorder %s178, %s180
    %p184 = scmp.eq.s32.totalorder %s18, 0
    %p185 = por %p183, %p184
    %p186 = scmp.ne.s32.totalorder %s178, %s180
    %p187 = scmp.eq.s32.totalorder %s23, 1
    %p188 = por %p186, %p187
    %p189 = scmp.ne.s32.totalorder %s180, %s181
    %p190 = scmp.eq.s32.totalorder %s23, 0
    %p191 = por %p189, %p190
    %p192 = scmp.ne.s32.totalorder %s180, %s181
    %p193 = scmp.eq.s32.totalorder %s24, 1
    %p194 = por %p192, %p193
    %p196 = scmp.ne.s32.totalorder %s181, %s195
    %p197 = scmp.eq.s32.totalorder %s24, 0
    %p198 = por %p196, %p197
    %s200 = sadd.s32 %s199, 1
    %p203 = scmp.eq.s32.totalorder %s18, 1
    %p204 = scmp.ne.s32.totalorder %s199, %s201
    %p205 = scmp.eq.s32.totalorder %s18, 0
    %p206 = por %p204, %p205
    %p207 = scmp.ne.s32.totalorder %s199, %s201
    %p208 = scmp.eq.s32.totalorder %s23, 1
    %p209 = por %p207, %p208
    %p210 = scmp.ne.s32.totalorder %s201, %s202
    %p211 = scmp.eq.s32.totalorder %s23, 0
    %p212 = por %p210, %p211
    %p213 = scmp.ne.s32.totalorder %s201, %s202
    %p214 = scmp.eq.s32.totalorder %s24, 1
    %p215 = por %p213, %p214
    %p217 = scmp.ne.s32.totalorder %s202, %s216
    %p218 = scmp.eq.s32.totalorder %s24, 0
    %p219 = por %p217, %p218
    %s221 = sadd.s32 %s220, 1
    %p224 = scmp.eq.s32.totalorder %s18, 1
    %p225 = scmp.ne.s32.totalorder %s220, %s222
    %p226 = scmp.eq.s32.totalorder %s18, 0
    %p227 = por %p225, %p226
    %p228 = scmp.ne.s32.totalorder %s220, %s222
    %p229 = scmp.eq.s32.totalorder %s23, 1
    %p230 = por %p228, %p229
    %p231 = scmp.ne.s32.totalorder %s222, %s223
    %p232 = scmp.eq.s32.totalorder %s23, 0
    %p233 = por %p231, %p232
    %p234 = scmp.ne.s32.totalorder %s222, %s223
    %p235 = scmp.eq.s32.totalorder %s24, 1
    %p236 = por %p234, %p235
    %p238 = scmp.ne.s32.totalorder %s223, %s237
    %p239 = scmp.eq.s32.totalorder %s24, 0
    %p240 = por %p238, %p239
    %s241 = ssub.s32 %s18, %s25
    %p242 = scmp.eq.s32.totalorder %s241, 0
    %s244 = sadd.s32 %s243, 1
    %s245 = scalar_select %p242, %s243, %s244
    %p248 = pneg %p242
    %p249 = scmp.eq.s32.totalorder %s18, 1
    %p250 = por %p248, %p249
    %p251 = scmp.ne.s32.totalorder %s243, %s246
    %p252 = scmp.eq.s32.totalorder %s18, 0
    %p253 = por %p251, %p252
    %p254 = scmp.ne.s32.totalorder %s243, %s246
    %p255 = scmp.eq.s32.totalorder %s23, 1
    %p256 = por %p254, %p255
    %p257 = scmp.ne.s32.totalorder %s246, %s247
    %p258 = scmp.eq.s32.totalorder %s23, 0
    %p259 = por %p257, %p258
    %p260 = scmp.ne.s32.totalorder %s246, %s247
    %p261 = scmp.eq.s32.totalorder %s24, 1
    %p262 = por %p260, %p261
    %p264 = scmp.ne.s32.totalorder %s247, %s263
    %p265 = scmp.eq.s32.totalorder %s24, 0
    %p266 = por %p264, %p265
    %p267 = scmp.le.s32.totalorder 1, %s18
    %p268 = scmp.lt.s32.totalorder %s18, 3
    %p269 = pnand %p267, %p268
    %p270 = pneg %p269
    // Predicated region
    $region9: #{cnn_model_forward.1} parent=5 // pred_check
      _
    $region10: #{cnn_model_forward.1} parent=5 // pred_check_branch
      %272 = sbr.rel (%p269) target = $region12
    $region11: #{cnn_model_forward.1} parent=5 // pred_region
      %s273 = ssub.s32 %s18, 1
      // Predicated region
      $region13: #{cnn_model_forward.1} parent=11 // pred_check
        %p274 = pneg %p65
      $region14: #{cnn_model_forward.1} parent=11 // pred_check_branch
        %276 = sbr.rel (%p274) target = $region16
      $region15: #{cnn_model_forward.1} parent=11 // pred_region
        _
      $region16: #{cnn_model_forward.1} parent=11 // pred_fallthru
        _
      // Predicated region
      $region17: #{cnn_model_forward.1} parent=11 // pred_check
        %p277 = pneg %p86
      $region18: #{cnn_model_forward.1} parent=11 // pred_check_branch
        %279 = sbr.rel (%p277) target = $region20
      $region19: #{cnn_model_forward.1} parent=11 // pred_region
        _
      $region20: #{cnn_model_forward.1} parent=11 // pred_fallthru
        _
      // Predicated region
      $region21: #{cnn_model_forward.1} parent=11 // pred_check
        %p280 = pneg %p107
      $region22: #{cnn_model_forward.1} parent=11 // pred_check_branch
        %282 = sbr.rel (%p280) target = $region24
      $region23: #{cnn_model_forward.1} parent=11 // pred_region
        _
      $region24: #{cnn_model_forward.1} parent=11 // pred_fallthru
        _
      // Predicated region
      $region25: #{cnn_model_forward.1} parent=11 // pred_check
        %p283 = pneg %p128
      $region26: #{cnn_model_forward.1} parent=11 // pred_check_branch
        %285 = sbr.rel (%p283) target = $region28
      $region27: #{cnn_model_forward.1} parent=11 // pred_region
        _
      $region28: #{cnn_model_forward.1} parent=11 // pred_fallthru
        _
      // Predicated region
      $region29: #{cnn_model_forward.1} parent=11 // pred_check
        %p286 = pneg %p149
      $region30: #{cnn_model_forward.1} parent=11 // pred_check_branch
        %288 = sbr.rel (%p286) target = $region32
      $region31: #{cnn_model_forward.1} parent=11 // pred_region
        _
      $region32: #{cnn_model_forward.1} parent=11 // pred_fallthru
        _
      // Predicated region
      $region33: #{cnn_model_forward.1} parent=11 // pred_check
        %p289 = pneg %p170
      $region34: #{cnn_model_forward.1} parent=11 // pred_check_branch
        %291 = sbr.rel (%p289) target = $region36
      $region35: #{cnn_model_forward.1} parent=11 // pred_region
        _
      $region36: #{cnn_model_forward.1} parent=11 // pred_fallthru
        _
      // Predicated region
      $region37: #{cnn_model_forward.1} parent=11 // pred_check
        %p292 = pneg %p191
      $region38: #{cnn_model_forward.1} parent=11 // pred_check_branch
        %294 = sbr.rel (%p292) target = $region40
      $region39: #{cnn_model_forward.1} parent=11 // pred_region
        _
      $region40: #{cnn_model_forward.1} parent=11 // pred_fallthru
        _
      // Predicated region
      $region41: #{cnn_model_forward.1} parent=11 // pred_check
        %p295 = pneg %p212
      $region42: #{cnn_model_forward.1} parent=11 // pred_check_branch
        %297 = sbr.rel (%p295) target = $region44
      $region43: #{cnn_model_forward.1} parent=11 // pred_region
        _
      $region44: #{cnn_model_forward.1} parent=11 // pred_fallthru
        _
      // Predicated region
      $region45: #{cnn_model_forward.1} parent=11 // pred_check
        %p298 = pneg %p233
      $region46: #{cnn_model_forward.1} parent=11 // pred_check_branch
        %300 = sbr.rel (%p298) target = $region48
      $region47: #{cnn_model_forward.1} parent=11 // pred_region
        _
      $region48: #{cnn_model_forward.1} parent=11 // pred_fallthru
        _
    $region12: #{cnn_model_forward.1} parent=5 // pred_fallthru
      _
    %p301 = scmp.lt.s32.totalorder %s18, 2
    // Predicated region
    $region49: #{cnn_model_forward.1} parent=5 // pred_check
      %p302 = pneg %p301
    $region50: #{cnn_model_forward.1} parent=5 // pred_check_branch
      %304 = sbr.rel (%p302) target = $region52
    $region51: #{cnn_model_forward.1} parent=5 // pred_region
      // Predicated region
      $region53: #{cnn_model_forward.1} parent=51 // pred_check
        %p305 = pneg %p38
      $region54: #{cnn_model_forward.1} parent=51 // pred_check_branch
        %307 = sbr.rel (%p305) target = $region56
      $region55: #{cnn_model_forward.1} parent=51 // pred_region
        %p308 = scmp.lt.s32.totalorder %s18, 1
        %s309 = scalar_select %p308, %s18, 1
        %s310 = smul.addr %s309, 2
        %s311 = smul.addr %s310, 8
        %s312 = scalar_lea.vmem %s0, %s311
      $region56: #{cnn_model_forward.1} parent=51 // pred_fallthru
        _
    $region52: #{cnn_model_forward.1} parent=5 // pred_fallthru
      _
    %p313 = scmp.le.s32.totalorder 1, %s18
    %p314 = scmp.lt.s32.totalorder %s18, 3
    %p315 = pnand %p313, %p314
    %p316 = pneg %p315
    // Predicated region
    $region57: #{cnn_model_forward.1} parent=5 // pred_check
      _
    $region58: #{cnn_model_forward.1} parent=5 // pred_check_branch
      %318 = sbr.rel (%p315) target = $region60
    $region59: #{cnn_model_forward.1} parent=5 // pred_region
      %s319 = ssub.s32 %s18, 1
      %p320 = scmp.lt.s32.totalorder %s23, 1
      %s321 = scalar_select %p320, %s23, 1
      %s322 = smul.addr %s321, 2
      %s323 = smul.addr %s322, 8
      %s324 = scalar_lea.vmem %s0, %s323
      %p325 = pneg %p44
      %p326 = pneg %p41
      %p327 = pneg %p65
      %p328 = pneg %p62
      %p329 = pneg %p86
      %p330 = pneg %p83
      %p331 = pneg %p107
      %p332 = pneg %p104
      %p333 = pneg %p128
      %p334 = pneg %p125
      %p335 = pneg %p149
      %p336 = pneg %p146
      %p337 = pneg %p170
      %p338 = pneg %p167
      %p339 = pneg %p191
      %p340 = pneg %p188
      %p341 = pneg %p212
      %p342 = pneg %p209
      %p343 = pneg %p233
      %p344 = pneg %p230
      %p345 = pneg %p259
      %p346 = pneg %p256
      %p347 = scmp.lt.s32.totalorder %s23, 1
      %s348 = scalar_select %p347, %s23, 1
      %s349 = scalar_lea.vmem %s10, %s348
      %p350 = scmp.lt.s32.totalorder %s23, 1
      %s351 = scalar_select %p350, %s23, 1
      %s352 = smul.addr %s351, 2
      %s353 = smul.addr %s352, 8
      %s354 = scalar_lea.vmem %s0, %s353
      %p355 = scmp.lt.s32.totalorder %s23, 1
      %s356 = scalar_select %p355, %s23, 1
      %s357 = scalar_lea.vmem %s10, %s356
      %v359 = vld [vmem:[%s354] sm:$0xff]
      %v360 = vld [vmem:[%s354 + $0x8] sm:$0xff]
      %v361 = vlaneseq
      %v362 = vand.u32 %v361, 127
      %v363 = vadd.s32 %v362, 128
      %vm364 = vcmp.lt.s32.totalorder %v362, 0
      %v365 = vsub.s32 0, %v362
      %v366 = vsel %vm364, %v365, %v362
      %v367 = vshrl.u32 %v366, 4
      %v368 = vand.u32 %v366, 15
      %v369 = vsub.s32 0, %v368
      %v370 = vsel %vm364, %v369, %v368
      %vm371 = vcmp.lt.s32.totalorder %v363, 0
      %v372 = vsub.s32 0, %v363
      %v373 = vsel %vm371, %v372, %v363
      %v374 = vshrl.u32 %v373, 4
      %v375 = vand.u32 %v373, 15
      %v376 = vsub.s32 0, %v375
      %v377 = vsel %vm371, %v376, %v375
      %vm378 = vcmp.ne.s32.totalorder %v370, 0
      %vm379 = vcmp.ne.s32.totalorder %v377, 0
      %vm380 = vcmp.lt.s32.totalorder %v370, 0
      %vm381 = vcmp.lt.s32.totalorder %v377, 0
      %vm382 = vmand %vm380, %vm378
      %vm383 = vmand %vm381, %vm379
      %v384 = vadd.s32 %v370, 16
      %v385 = vadd.s32 %v377, 16
      %v386 = vsel %vm382, %v384, %v370
      %v387 = vsel %vm383, %v385, %v377
      %vm388 = vcmp.gt.s32.totalorder %v386, 0
      %vm389 = vcmp.gt.s32.totalorder %v387, 0
      %v390 = vsel %vm388, 1, 0
      %v391 = vsel %vm389, 1, 0
      %v392 = vcvt.s32.f32 %v390
      %v393 = vcvt.s32.f32 %v391
      %vm394 = vcmp.lt.s32.totalorder %v386, 15
      %vm395 = vcmp.lt.s32.totalorder %v387, 15
      %v396 = vsel %vm394, 1, 0
      %v397 = vsel %vm395, 1, 0
      %v398 = vcvt.s32.f32 %v396
      %v399 = vcvt.s32.f32 %v397
      %402 = vrot.lane.b32.xlu0 %v359, 17
      %v403 = vpop.permute.xlu0 %402
      %404 = vrot.lane.b32.xlu0 %v360, 17
      %v405 = vpop.permute.xlu0 %404
      %vm406 = vcmask 138240
      %v407 = vsel %vm406, %v403, %v405
      %v410 = vsel %vm406, 0.0, %v403
      %v411 = vmul.f32 %v410, %v392
      %v412 = vmul.f32 %v407, %v393
      %413 = vrot.lane.b32.xlu0 %v359, 16
      %v414 = vpop.permute.xlu0 %413
      %415 = vrot.lane.b32.xlu0 %v360, 16
      %v416 = vpop.permute.xlu0 %415
      %vm417 = vcmask 130048
      %v418 = vsel %vm417, %v414, %v416
      %v421 = vsel %vm417, 0.0, %v414
      %422 = vrot.lane.b32.xlu0 %v359, 15
      %v423 = vpop.permute.xlu0 %422
      %424 = vrot.lane.b32.xlu0 %v360, 15
      %v425 = vpop.permute.xlu0 %424
      %vm426 = vcmask 121856
      %v427 = vsel %vm426, %v423, %v425
      %v430 = vsel %vm426, 0.0, %v423
      %v431 = vmul.f32 %v430, %v398
      %v432 = vmul.f32 %v427, %v399
      %433 = vrot.lane.b32.xlu0 %v359, 1
      %v434 = vpop.permute.xlu0 %433
      %435 = vrot.lane.b32.xlu0 %v360, 1
      %v436 = vpop.permute.xlu0 %435
      %vm437 = vcmask 7168
      %v438 = vsel %vm437, %v434, %v436
      %v441 = vsel %vm437, 0.0, %v434
      %v442 = vmul.f32 %v441, %v392
      %v443 = vmul.f32 %v438, %v393
      %444 = vrot.lane.b32.xlu0 %v359, 127
      %v445 = vpop.permute.xlu0 %444
      %446 = vrot.lane.b32.xlu0 %v360, 127
      %v447 = vpop.permute.xlu0 %446
      %vm448 = vcmask 1039360
      %v449 = vsel %vm448, %v445, %v447
      %v452 = vsel %vm448, %v447, 0.0
      %v453 = vmul.f32 %v449, %v398
      %v454 = vmul.f32 %v452, %v399
      %455 = vrot.lane.b32.xlu0 %v359, 113
      %v456 = vpop.permute.xlu0 %455
      %457 = vrot.lane.b32.xlu0 %v360, 113
      %v458 = vpop.permute.xlu0 %457
      %vm459 = vcmask 924672
      %v460 = vsel %vm459, %v456, %v458
      %v463 = vsel %vm459, %v458, 0.0
      %v464 = vmul.f32 %v460, %v392
      %v465 = vmul.f32 %v463, %v393
      %466 = vrot.lane.b32.xlu0 %v359, 112
      %v467 = vpop.permute.xlu0 %466
      %468 = vrot.lane.b32.xlu0 %v360, 112
      %v469 = vpop.permute.xlu0 %468
      %vm470 = vcmask 916480
      %v471 = vsel %vm470, %v467, %v469
      %v474 = vsel %vm470, %v469, 0.0
      %475 = vrot.lane.b32.xlu0 %v359, 111
      %v476 = vpop.permute.xlu0 %475
      %477 = vrot.lane.b32.xlu0 %v360, 111
      %v478 = vpop.permute.xlu0 %477
      %vm479 = vcmask 908288
      %v480 = vsel %vm479, %v476, %v478
      %v483 = vsel %vm479, %v478, 0.0
      %v484 = vmul.f32 %v480, %v398
      %v485 = vmul.f32 %v483, %v399
      %v486 = vpack.c.bf16 %v421, %v411
      %v487 = vpack.c.bf16 %v418, %v412
      %v488 = vpack.c.bf16 %v442, %v431
      %v489 = vpack.c.bf16 %v443, %v432
      %v490 = vpack.c.bf16 %v453, %v359
      %v491 = vpack.c.bf16 %v454, %v360
      %v492 = vpack.c.bf16 %v471, %v464
      %v493 = vpack.c.bf16 %v474, %v465
      %v494 = vpack.c.bf16 %v484, %v484
      %v495 = vpack.c.bf16 %v485, %v485
      %v496 = vld [vmem:[%s1] sm:$0xf]
      %v497 = vld [vmem:[%s1 + $0x4] sm:$0xf]
      %v498 = vld [vmem:[%s1 + $0x8] sm:$0xf]
      %v499 = vld [vmem:[%s1 + $0xc] sm:$0xf]
      %v500 = vld [vmem:[%s1 + $0x10] sm:$0xf]
      %v501 = vld [vmem:[%s1 + $0x14] sm:$0xf]
      %v502 = vld [vmem:[%s2] sm:$0xff]
      %v503 = vld [vmem:[%s2 + $0x8] sm:$0xff]
      %v504 = vld [vmem:[%s2 + $0x10] sm:$0xff]
      %v505 = vld [vmem:[%s2 + $0x18] sm:$0xff]
      %v506 = vld [vmem:[%s2 + $0x20] sm:$0xff]
      %v507 = vld [vmem:[%s2 + $0x28] sm:$0xff]
      %509 = vset.pattern.permute.xlu0 0
      %510 = vperm.xlu0 %509, %v502
      %v511 = vpop.permute.xlu0 %510
      %514 = vset.pattern.permute.xlu0 0
      %515 = vperm.xlu0 %514, %v503
      %v516 = vpop.permute.xlu0 %515
      %519 = vset.pattern.permute.xlu0 0
      %520 = vperm.xlu0 %519, %v504
      %v521 = vpop.permute.xlu0 %520
      %524 = vset.pattern.permute.xlu0 0
      %525 = vperm.xlu0 %524, %v505
      %v526 = vpop.permute.xlu0 %525
      %529 = vset.pattern.permute.xlu0 0
      %530 = vperm.xlu0 %529, %v506
      %v531 = vpop.permute.xlu0 %530
      %534 = vset.pattern.permute.xlu0 0
      %535 = vperm.xlu0 %534, %v507
      %v536 = vpop.permute.xlu0 %535
      %v544 = vunpack.c.l.b16 %v496
      %v545 = vunpack.c.l.b16 %v497
      %v546 = vunpack.c.l.b16 %v498
      %v547 = vunpack.c.l.b16 %v499
      %v548 = vunpack.c.l.b16 %v500
      %v549 = vunpack.c.l.b16 %v501
      %v550 = vpack.c.b16 %v545, %v544
      %v551 = vpack.c.b16 %v547, %v546
      %v552 = vpack.c.b16 %v549, %v548
      %vm553 = vcmask 588800
      %v555 = vsel %vm553, %v550, 0
      %v558 = vsel %vm553, %v551, 0
      %v561 = vsel %vm553, %v552, 0
      %vm563 = vcmask 1043456
      %v565 = vsel %vm563, %v494, 0
      %v568 = vsel %vm563, %v495, 0
      %570 = vmatprep.subr.bf16.mxu0 %v487
      %571 = vmatpush1.bf16.msra.mxu0 %v486
      %572 = vmatprep.subr.bf16.mxu0 %v489
      %573 = vmatpush1.bf16.msra.mxu0 %v488
      %574 = vmatprep.subr.bf16.mxu0 %v491
      %575 = vmatpush1.bf16.msra.mxu0 %v490
      %576 = vmatprep.subr.bf16.mxu0 %v493
      %577 = vmatpush1.bf16.msra.mxu0 %v492
      %578 = vmatprep.subr.bf16.mxu0 %v568
      %579 = vmatpush1.bf16.msra.mxu0 %v565
      %580 = vmatprep.subr.bf16.mxu0 0
      %581 = vmatpush1.bf16.msra.mxu0 0
      %582 = vmatprep.subr.bf16.mxu0 0
      %583 = vmatpush1.bf16.msra.mxu0 0
      %584 = vmatprep.subr.bf16.mxu0 0
      %585 = vmatpush1.bf16.msra.mxu0 0
      %586 = vmatprep.subr.bf16.mxu0 0
      %587 = vmatpush1.bf16.msra.mxu0 0
      %588 = vmatprep.subr.bf16.mxu0 0
      %589 = vmatpush1.bf16.msra.mxu0 0
      %590 = vmatprep.subr.bf16.mxu0 0
      %591 = vmatpush1.bf16.msra.mxu0 0
      %592 = vmatprep.subr.bf16.mxu0 0
      %593 = vmatpush1.bf16.msra.mxu0 0
      %594 = vmatprep.subr.bf16.mxu0 0
      %595 = vmatpush1.bf16.msra.mxu0 0
      %596 = vmatprep.subr.bf16.mxu0 0
      %597 = vmatpush1.bf16.msra.mxu0 0
      %598 = vmatprep.subr.bf16.mxu0 0
      %599 = vmatpush1.bf16.msra.mxu0 0
      %600 = vmatprep.subr.bf16.mxu0 0
      %601 = vmatpush1.bf16.msra.mxu0 0
      %602 = vmatprep.mubr.bf16.mxu0 0
      %603 = vmatmul.mubr.bf16.gmra.mrb[0].mxu0 %v555
      %v604 = vpop.f32.mrb[0].mxu0
      %v605 = vadd.f32 %v511, %v604
      %v606 = vpop.f32.mrb[0].mxu0
      %v607 = vadd.f32 %v511, %v606
      %v608 = vpop.f32.mrb[0].mxu0
      %v609 = vadd.f32 %v516, %v608
      %v610 = vpop.f32.mrb[0].mxu0
      %v611 = vadd.f32 %v516, %v610
      %612 = vmatprep.mubr.bf16.mxu0 0
      %613 = vmatmul.mubr.bf16.gmra.mrb[0].mxu0 %v558
      %v614 = vpop.f32.mrb[0].mxu0
      %v615 = vadd.f32 %v521, %v614
      %v616 = vpop.f32.mrb[0].mxu0
      %v617 = vadd.f32 %v521, %v616
      %v618 = vpop.f32.mrb[0].mxu0
      %v619 = vadd.f32 %v526, %v618
      %v620 = vpop.f32.mrb[0].mxu0
      %v621 = vadd.f32 %v526, %v620
      %622 = vmatprep.mubr.bf16.mxu0 0
      %623 = vmatmul.mubr.bf16.gmra.mrb[0].mxu0 %v561
      %v624 = vpop.f32.mrb[0].mxu0
      %v625 = vadd.f32 %v531, %v624
      %v626 = vpop.f32.mrb[0].mxu0
      %v627 = vadd.f32 %v531, %v626
      %v628 = vpop.f32.mrb[0].mxu0
      %v629 = vadd.f32 %v536, %v628
      %v630 = vpop.f32.mrb[0].mxu0
      %v631 = vadd.f32 %v536, %v630
      %632 = vdwg.mxu0
      %v633 = vmax.f32 %v605, 0.0
      %v634 = vmax.f32 %v607, 0.0
      %v635 = vmax.f32 %v609, 0.0
      %v636 = vmax.f32 %v611, 0.0
      %v637 = vmax.f32 %v615, 0.0
      %v638 = vmax.f32 %v617, 0.0
      %v639 = vmax.f32 %v619, 0.0
      %v640 = vmax.f32 %v621, 0.0
      %v641 = vmax.f32 %v625, 0.0
      %v642 = vmax.f32 %v627, 0.0
      %v643 = vmax.f32 %v629, 0.0
      %v644 = vmax.f32 %v631, 0.0
      %649 = vrot.lane.b32.xlu0 %v633, 17
      %v650 = vpop.permute.xlu0 %649
      %651 = vrot.lane.b32.xlu0 %v634, 17
      %v652 = vpop.permute.xlu0 %651
      %653 = vrot.lane.b32.xlu0 %v635, 17
      %v654 = vpop.permute.xlu0 %653
      %655 = vrot.lane.b32.xlu0 %v636, 17
      %v656 = vpop.permute.xlu0 %655
      %v657 = vsel %vm406, %v650, %v652
      %v658 = vsel %vm406, %v654, %v656
      %v663 = vsel %vm406, 0.0, %v650
      %v664 = vsel %vm406, 0.0, %v654
      %v665 = vmul.f32 %v663, %v392
      %v666 = vmul.f32 %v657, %v393
      %v667 = vmul.f32 %v664, %v392
      %v668 = vmul.f32 %v658, %v393
      %669 = vrot.lane.b32.xlu0 %v633, 16
      %v670 = vpop.permute.xlu0 %669
      %671 = vrot.lane.b32.xlu0 %v634, 16
      %v672 = vpop.permute.xlu0 %671
      %673 = vrot.lane.b32.xlu0 %v635, 16
      %v674 = vpop.permute.xlu0 %673
      %675 = vrot.lane.b32.xlu0 %v636, 16
      %v676 = vpop.permute.xlu0 %675
      %v677 = vsel %vm417, %v670, %v672
      %v678 = vsel %vm417, %v674, %v676
      %v683 = vsel %vm417, 0.0, %v670
      %v684 = vsel %vm417, 0.0, %v674
      %685 = vrot.lane.b32.xlu0 %v633, 15
      %v686 = vpop.permute.xlu0 %685
      %687 = vrot.lane.b32.xlu0 %v634, 15
      %v688 = vpop.permute.xlu0 %687
      %689 = vrot.lane.b32.xlu0 %v635, 15
      %v690 = vpop.permute.xlu0 %689
      %691 = vrot.lane.b32.xlu0 %v636, 15
      %v692 = vpop.permute.xlu0 %691
      %v693 = vsel %vm426, %v686, %v688
      %v694 = vsel %vm426, %v690, %v692
      %v699 = vsel %vm426, 0.0, %v686
      %v700 = vsel %vm426, 0.0, %v690
      %v701 = vmul.f32 %v699, %v398
      %v702 = vmul.f32 %v693, %v399
      %v703 = vmul.f32 %v700, %v398
      %v704 = vmul.f32 %v694, %v399
      %705 = vrot.lane.b32.xlu0 %v633, 1
      %v706 = vpop.permute.xlu0 %705
      %707 = vrot.lane.b32.xlu0 %v634, 1
      %v708 = vpop.permute.xlu0 %707
      %709 = vrot.lane.b32.xlu0 %v635, 1
      %v710 = vpop.permute.xlu0 %709
      %711 = vrot.lane.b32.xlu0 %v636, 1
      %v712 = vpop.permute.xlu0 %711
      %v713 = vsel %vm437, %v706, %v708
      %v714 = vsel %vm437, %v710, %v712
      %v719 = vsel %vm437, 0.0, %v706
      %v720 = vsel %vm437, 0.0, %v710
      %v721 = vmul.f32 %v719, %v392
      %v722 = vmul.f32 %v713, %v393
      %v723 = vmul.f32 %v720, %v392
      %v724 = vmul.f32 %v714, %v393
      %725 = vrot.lane.b32.xlu0 %v633, 127
      %v726 = vpop.permute.xlu0 %725
      %727 = vrot.lane.b32.xlu0 %v634, 127
      %v728 = vpop.permute.xlu0 %727
      %729 = vrot.lane.b32.xlu0 %v635, 127
      %v730 = vpop.permute.xlu0 %729
      %731 = vrot.lane.b32.xlu0 %v636, 127
      %v732 = vpop.permute.xlu0 %731
      %v733 = vsel %vm448, %v726, %v728
      %v734 = vsel %vm448, %v730, %v732
      %v739 = vsel %vm448, %v728, 0.0
      %v740 = vsel %vm448, %v732, 0.0
      %v741 = vmul.f32 %v733, %v398
      %v742 = vmul.f32 %v739, %v399
      %v743 = vmul.f32 %v734, %v398
      %v744 = vmul.f32 %v740, %v399
      %745 = vrot.lane.b32.xlu0 %v633, 113
      %v746 = vpop.permute.xlu0 %745
      %747 = vrot.lane.b32.xlu0 %v634, 113
      %v748 = vpop.permute.xlu0 %747
      %749 = vrot.lane.b32.xlu0 %v635, 113
      %v750 = vpop.permute.xlu0 %749
      %751 = vrot.lane.b32.xlu0 %v636, 113
      %v752 = vpop.permute.xlu0 %751
      %v753 = vsel %vm459, %v746, %v748
      %v754 = vsel %vm459, %v750, %v752
      %v759 = vsel %vm459, %v748, 0.0
      %v760 = vsel %vm459, %v752, 0.0
      %v761 = vmul.f32 %v753, %v392
      %v762 = vmul.f32 %v759, %v393
      %v763 = vmul.f32 %v754, %v392
      %v764 = vmul.f32 %v760, %v393
      %765 = vrot.lane.b32.xlu0 %v633, 112
      %v766 = vpop.permute.xlu0 %765
      %767 = vrot.lane.b32.xlu0 %v634, 112
      %v768 = vpop.permute.xlu0 %767
      %769 = vrot.lane.b32.xlu0 %v635, 112
      %v770 = vpop.permute.xlu0 %769
      %771 = vrot.lane.b32.xlu0 %v636, 112
      %v772 = vpop.permute.xlu0 %771
      %v773 = vsel %vm470, %v766, %v768
      %v774 = vsel %vm470, %v770, %v772
      %v779 = vsel %vm470, %v768, 0.0
      %v780 = vsel %vm470, %v772, 0.0
      %781 = vrot.lane.b32.xlu0 %v633, 111
      %v782 = vpop.permute.xlu0 %781
      %783 = vrot.lane.b32.xlu0 %v634, 111
      %v784 = vpop.permute.xlu0 %783
      %785 = vrot.lane.b32.xlu0 %v635, 111
      %v786 = vpop.permute.xlu0 %785
      %787 = vrot.lane.b32.xlu0 %v636, 111
      %v788 = vpop.permute.xlu0 %787
      %v789 = vsel %vm479, %v782, %v784
      %v790 = vsel %vm479, %v786, %v788
      %v795 = vsel %vm479, %v784, 0.0
      %v796 = vsel %vm479, %v788, 0.0
      %v797 = vmul.f32 %v789, %v398
      %v798 = vmul.f32 %v795, %v399
      %v799 = vmul.f32 %v790, %v398
      %v800 = vmul.f32 %v796, %v399
      %v801 = vpack.c.bf16 %v667, %v665
      %v802 = vpack.c.bf16 %v668, %v666
      %v803 = vpack.c.bf16 %v684, %v683
      %v804 = vpack.c.bf16 %v678, %v677
      %v805 = vpack.c.bf16 %v703, %v701
      %v806 = vpack.c.bf16 %v704, %v702
      %v807 = vpack.c.bf16 %v723, %v721
      %v808 = vpack.c.bf16 %v724, %v722
      %v809 = vpack.c.bf16 %v635, %v633
      %v810 = vpack.c.bf16 %v636, %v634
      %v811 = vpack.c.bf16 %v743, %v741
      %v812 = vpack.c.bf16 %v744, %v742
      %v813 = vpack.c.bf16 %v763, %v761
      %v814 = vpack.c.bf16 %v764, %v762
      %v815 = vpack.c.bf16 %v774, %v773
      %v816 = vpack.c.bf16 %v780, %v779
      %v817 = vpack.c.bf16 %v799, %v797
      %v818 = vpack.c.bf16 %v800, %v798
      %v819 = vld [vmem:[%s3] sm:$0xff]
      %v820 = vld [vmem:[%s3 + $0x8] sm:$0xff]
      %v821 = vld [vmem:[%s4] sm:$0xff]
      %v822 = vld [vmem:[%s4 + $0x8] sm:$0xff]
      %824 = vset.pattern.permute.xlu0 0
      %825 = vperm.xlu0 %824, %v821
      %v826 = vpop.permute.xlu0 %825
      %829 = vset.pattern.permute.xlu0 0
      %830 = vperm.xlu0 %829, %v822
      %v831 = vpop.permute.xlu0 %830
      %v835 = vunpack.c.l.b16 %v819
      %v836 = vunpack.c.h.b16 %v819
      %v837 = vunpack.c.l.b16 %v820
      %v838 = vunpack.c.h.b16 %v820
      %v839 = vpack.c.b16 %v837, %v835
      %v840 = vpack.c.b16 %v838, %v836
      %v843 = vsel %vm417, %v840, 0
      %845 = vmatprep.subr.bf16.mxu0 %v802
      %846 = vmatpush1.bf16.msra.mxu0 %v801
      %847 = vmatprep.subr.bf16.mxu0 %v804
      %848 = vmatpush1.bf16.msra.mxu0 %v803
      %849 = vmatprep.subr.bf16.mxu0 %v806
      %850 = vmatpush1.bf16.msra.mxu0 %v805
      %851 = vmatprep.subr.bf16.mxu0 %v808
      %852 = vmatpush1.bf16.msra.mxu0 %v807
      %853 = vmatprep.subr.bf16.mxu0 %v810
      %854 = vmatpush1.bf16.msra.mxu0 %v809
      %855 = vmatprep.subr.bf16.mxu0 %v812
      %856 = vmatpush1.bf16.msra.mxu0 %v811
      %857 = vmatprep.subr.bf16.mxu0 %v814
      %858 = vmatpush1.bf16.msra.mxu0 %v813
      %859 = vmatprep.subr.bf16.mxu0 %v816
      %860 = vmatpush1.bf16.msra.mxu0 %v815
      %861 = vmatprep.subr.bf16.mxu0 %v818
      %862 = vmatpush1.bf16.msra.mxu0 %v817
      %863 = vmatprep.subr.bf16.mxu0 0
      %864 = vmatpush1.bf16.msra.mxu0 0
      %865 = vmatprep.subr.bf16.mxu0 0
      %866 = vmatpush1.bf16.msra.mxu0 0
      %867 = vmatprep.subr.bf16.mxu0 0
      %868 = vmatpush1.bf16.msra.mxu0 0
      %869 = vmatprep.subr.bf16.mxu0 0
      %870 = vmatpush1.bf16.msra.mxu0 0
      %871 = vmatprep.subr.bf16.mxu0 0
      %872 = vmatpush1.bf16.msra.mxu0 0
      %873 = vmatprep.subr.bf16.mxu0 0
      %874 = vmatpush1.bf16.msra.mxu0 0
      %875 = vmatprep.subr.bf16.mxu0 0
      %876 = vmatpush1.bf16.msra.mxu0 0
      %877 = vmatprep.mubr.bf16.mxu0 %v843
      %878 = vmatmul.mubr.bf16.gmra.mrb[0].mxu0 %v839
      %v879 = vpop.f32.mrb[0].mxu0
      %v880 = vadd.f32 %v826, %v879
      %v881 = vpop.f32.mrb[0].mxu0
      %v882 = vadd.f32 %v826, %v881
      %v883 = vpop.f32.mrb[0].mxu0
      %v884 = vadd.f32 %v831, %v883
      %v885 = vpop.f32.mrb[0].mxu0
      %v886 = vadd.f32 %v831, %v885
      %887 = vdwg.mxu0
      %v888 = vmax.f32 %v880, 0.0
      %v889 = vmax.f32 %v882, 0.0
      %v890 = vmax.f32 %v884, 0.0
      %v891 = vmax.f32 %v886, 0.0
      %896 = vrot.lane.b32.xlu0 %v888, 17
      %v897 = vpop.permute.xlu0 %896
      %898 = vrot.lane.b32.xlu0 %v889, 17
      %v899 = vpop.permute.xlu0 %898
      %900 = vrot.lane.b32.xlu0 %v890, 17
      %v901 = vpop.permute.xlu0 %900
      %902 = vrot.lane.b32.xlu0 %v891, 17
      %v903 = vpop.permute.xlu0 %902
      %v904 = vsel %vm406, %v897, %v899
      %v905 = vsel %vm406, %v901, %v903
      %v910 = vsel %vm406, 0.0, %v897
      %v911 = vsel %vm406, 0.0, %v901
      %v912 = vmul.f32 %v910, %v392
      %v913 = vmul.f32 %v904, %v393
      %v914 = vmul.f32 %v911, %v392
      %v915 = vmul.f32 %v905, %v393
      %916 = vrot.lane.b32.xlu0 %v888, 16
      %v917 = vpop.permute.xlu0 %916
      %918 = vrot.lane.b32.xlu0 %v889, 16
      %v919 = vpop.permute.xlu0 %918
      %920 = vrot.lane.b32.xlu0 %v890, 16
      %v921 = vpop.permute.xlu0 %920
      %922 = vrot.lane.b32.xlu0 %v891, 16
      %v923 = vpop.permute.xlu0 %922
      %v924 = vsel %vm417, %v917, %v919
      %v925 = vsel %vm417, %v921, %v923
      %v930 = vsel %vm417, 0.0, %v917
      %v931 = vsel %vm417, 0.0, %v921
      %932 = vrot.lane.b32.xlu0 %v888, 15
      %v933 = vpop.permute.xlu0 %932
      %934 = vrot.lane.b32.xlu0 %v889, 15
      %v935 = vpop.permute.xlu0 %934
      %936 = vrot.lane.b32.xlu0 %v890, 15
      %v937 = vpop.permute.xlu0 %936
      %938 = vrot.lane.b32.xlu0 %v891, 15
      %v939 = vpop.permute.xlu0 %938
      %v940 = vsel %vm426, %v933, %v935
      %v941 = vsel %vm426, %v937, %v939
      %v946 = vsel %vm426, 0.0, %v933
      %v947 = vsel %vm426, 0.0, %v937
      %v948 = vmul.f32 %v946, %v398
      %v949 = vmul.f32 %v940, %v399
      %v950 = vmul.f32 %v947, %v398
      %v951 = vmul.f32 %v941, %v399
      %952 = vrot.lane.b32.xlu0 %v888, 1
      %v953 = vpop.permute.xlu0 %952
      %954 = vrot.lane.b32.xlu0 %v889, 1
      %v955 = vpop.permute.xlu0 %954
      %956 = vrot.lane.b32.xlu0 %v890, 1
      %v957 = vpop.permute.xlu0 %956
      %958 = vrot.lane.b32.xlu0 %v891, 1
      %v959 = vpop.permute.xlu0 %958
      %v960 = vsel %vm437, %v953, %v955
      %v961 = vsel %vm437, %v957, %v959
      %v966 = vsel %vm437, 0.0, %v953
      %v967 = vsel %vm437, 0.0, %v957
      %v968 = vmul.f32 %v966, %v392
      %v969 = vmul.f32 %v960, %v393
      %v970 = vmul.f32 %v967, %v392
      %v971 = vmul.f32 %v961, %v393
      %972 = vrot.lane.b32.xlu0 %v888, 127
      %v973 = vpop.permute.xlu0 %972
      %974 = vrot.lane.b32.xlu0 %v889, 127
      %v975 = vpop.permute.xlu0 %974
      %976 = vrot.lane.b32.xlu0 %v890, 127
      %v977 = vpop.permute.xlu0 %976
      %978 = vrot.lane.b32.xlu0 %v891, 127
      %v979 = vpop.permute.xlu0 %978
      %v980 = vsel %vm448, %v973, %v975
      %v981 = vsel %vm448, %v977, %v979
      %v986 = vsel %vm448, %v975, 0.0
      %v987 = vsel %vm448, %v979, 0.0
      %v988 = vmul.f32 %v980, %v398
      %v989 = vmul.f32 %v986, %v399
      %v990 = vmul.f32 %v981, %v398
      %v991 = vmul.f32 %v987, %v399
      %992 = vrot.lane.b32.xlu0 %v888, 113
      %v993 = vpop.permute.xlu0 %992
      %994 = vrot.lane.b32.xlu0 %v889, 113
      %v995 = vpop.permute.xlu0 %994
      %996 = vrot.lane.b32.xlu0 %v890, 113
      %v997 = vpop.permute.xlu0 %996
      %998 = vrot.lane.b32.xlu0 %v891, 113
      %v999 = vpop.permute.xlu0 %998
      %v1000 = vsel %vm459, %v993, %v995
      %v1001 = vsel %vm459, %v997, %v999
      %v1006 = vsel %vm459, %v995, 0.0
      %v1007 = vsel %vm459, %v999, 0.0
      %v1008 = vmul.f32 %v1000, %v392
      %v1009 = vmul.f32 %v1006, %v393
      %v1010 = vmul.f32 %v1001, %v392
      %v1011 = vmul.f32 %v1007, %v393
      %1012 = vrot.lane.b32.xlu0 %v888, 112
      %v1013 = vpop.permute.xlu0 %1012
      %1014 = vrot.lane.b32.xlu0 %v889, 112
      %v1015 = vpop.permute.xlu0 %1014
      %1016 = vrot.lane.b32.xlu0 %v890, 112
      %v1017 = vpop.permute.xlu0 %1016
      %1018 = vrot.lane.b32.xlu0 %v891, 112
      %v1019 = vpop.permute.xlu0 %1018
      %v1020 = vsel %vm470, %v1013, %v1015
      %v1021 = vsel %vm470, %v1017, %v1019
      %v1026 = vsel %vm470, %v1015, 0.0
      %v1027 = vsel %vm470, %v1019, 0.0
      %1028 = vrot.lane.b32.xlu0 %v888, 111
      %v1029 = vpop.permute.xlu0 %1028
      %1030 = vrot.lane.b32.xlu0 %v889, 111
      %v1031 = vpop.permute.xlu0 %1030
      %1032 = vrot.lane.b32.xlu0 %v890, 111
      %v1033 = vpop.permute.xlu0 %1032
      %1034 = vrot.lane.b32.xlu0 %v891, 111
      %v1035 = vpop.permute.xlu0 %1034
      %v1036 = vsel %vm479, %v1029, %v1031
      %v1037 = vsel %vm479, %v1033, %v1035
      %v1042 = vsel %vm479, %v1031, 0.0
      %v1043 = vsel %vm479, %v1035, 0.0
      %v1044 = vmul.f32 %v1036, %v398
      %v1045 = vmul.f32 %v1042, %v399
      %v1046 = vmul.f32 %v1037, %v398
      %v1047 = vmul.f32 %v1043, %v399
      %v1048 = vpack.c.bf16 %v914, %v912
      %v1049 = vpack.c.bf16 %v915, %v913
      %v1050 = vpack.c.bf16 %v931, %v930
      %v1051 = vpack.c.bf16 %v925, %v924
      %v1052 = vpack.c.bf16 %v950, %v948
      %v1053 = vpack.c.bf16 %v951, %v949
      %v1054 = vpack.c.bf16 %v970, %v968
      %v1055 = vpack.c.bf16 %v971, %v969
      %v1056 = vpack.c.bf16 %v890, %v888
      %v1057 = vpack.c.bf16 %v891, %v889
      %v1058 = vpack.c.bf16 %v990, %v988
      %v1059 = vpack.c.bf16 %v991, %v989
      %v1060 = vpack.c.bf16 %v1010, %v1008
      %v1061 = vpack.c.bf16 %v1011, %v1009
      %v1062 = vpack.c.bf16 %v1021, %v1020
      %v1063 = vpack.c.bf16 %v1027, %v1026
      %v1064 = vpack.c.bf16 %v1046, %v1044
      %v1065 = vpack.c.bf16 %v1047, %v1045
      %v1066 = vld [vmem:[%s5] sm:$0xff]
      %v1067 = vld [vmem:[%s5 + $0x8] sm:$0xff]
      %v1068 = vld [vmem:[%s6] sm:$0xff]
      %v1069 = vld [vmem:[%s6 + $0x8] sm:$0xff]
      %1071 = vset.pattern.permute.xlu0 0
      %1072 = vperm.xlu0 %1071, %v1068
      %v1073 = vpop.permute.xlu0 %1072
      %1076 = vset.pattern.permute.xlu0 0
      %1077 = vperm.xlu0 %1076, %v1069
      %v1078 = vpop.permute.xlu0 %1077
      %v1082 = vunpack.c.l.b16 %v1066
      %v1083 = vunpack.c.h.b16 %v1066
      %v1084 = vunpack.c.l.b16 %v1067
      %v1085 = vunpack.c.h.b16 %v1067
      %v1086 = vpack.c.b16 %v1084, %v1082
      %v1087 = vpack.c.b16 %v1085, %v1083
      %v1090 = vsel %vm417, %v1087, 0
      %1092 = vmatprep.subr.bf16.mxu0 %v1049
      %1093 = vmatpush1.bf16.msra.mxu0 %v1048
      %1094 = vmatprep.subr.bf16.mxu0 %v1051
      %1095 = vmatpush1.bf16.msra.mxu0 %v1050
      %1096 = vmatprep.subr.bf16.mxu0 %v1053
      %1097 = vmatpush1.bf16.msra.mxu0 %v1052
      %1098 = vmatprep.subr.bf16.mxu0 %v1055
      %1099 = vmatpush1.bf16.msra.mxu0 %v1054
      %1100 = vmatprep.subr.bf16.mxu0 %v1057
      %1101 = vmatpush1.bf16.msra.mxu0 %v1056
      %1102 = vmatprep.subr.bf16.mxu0 %v1059
      %1103 = vmatpush1.bf16.msra.mxu0 %v1058
      %1104 = vmatprep.subr.bf16.mxu0 %v1061
      %1105 = vmatpush1.bf16.msra.mxu0 %v1060
      %1106 = vmatprep.subr.bf16.mxu0 %v1063
      %1107 = vmatpush1.bf16.msra.mxu0 %v1062
      %1108 = vmatprep.subr.bf16.mxu0 %v1065
      %1109 = vmatpush1.bf16.msra.mxu0 %v1064
      %1110 = vmatprep.subr.bf16.mxu0 0
      %1111 = vmatpush1.bf16.msra.mxu0 0
      %1112 = vmatprep.subr.bf16.mxu0 0
      %1113 = vmatpush1.bf16.msra.mxu0 0
      %1114 = vmatprep.subr.bf16.mxu0 0
      %1115 = vmatpush1.bf16.msra.mxu0 0
      %1116 = vmatprep.subr.bf16.mxu0 0
      %1117 = vmatpush1.bf16.msra.mxu0 0
      %1118 = vmatprep.subr.bf16.mxu0 0
      %1119 = vmatpush1.bf16.msra.mxu0 0
      %1120 = vmatprep.subr.bf16.mxu0 0
      %1121 = vmatpush1.bf16.msra.mxu0 0
      %1122 = vmatprep.subr.bf16.mxu0 0
      %1123 = vmatpush1.bf16.msra.mxu0 0
      %1124 = vmatprep.mubr.bf16.mxu0 %v1090
      %1125 = vmatmul.mubr.bf16.gmra.mrb[0].mxu0 %v1086
      %v1126 = vpop.f32.mrb[0].mxu0
      %v1127 = vadd.f32 %v1073, %v1126
      %v1128 = vpop.f32.mrb[0].mxu0
      %v1129 = vadd.f32 %v1073, %v1128
      %v1130 = vpop.f32.mrb[0].mxu0
      %v1131 = vadd.f32 %v1078, %v1130
      %v1132 = vpop.f32.mrb[0].mxu0
      %v1133 = vadd.f32 %v1078, %v1132
      %1134 = vdwg.mxu0
      %v1135 = vadd.f32 %v1127, %v633
      %v1136 = vadd.f32 %v1129, %v634
      %v1137 = vadd.f32 %v1131, %v635
      %v1138 = vadd.f32 %v1133, %v636
      %v1139 = vmax.f32 %v1135, 0.0
      %v1140 = vmax.f32 %v1136, 0.0
      %v1141 = vmax.f32 %v1137, 0.0
      %v1142 = vmax.f32 %v1138, 0.0
      %v1143 = vadd.f32 %v1139, %v1140
      %1144 = vadd.xlane.f32.xlu0 %v1143
      %v1145 = vpop.xlane.xlu0 %1144
      %v1146 = vadd.f32 %v1141, %v1142
      %1147 = vadd.xlane.f32.xlu0 %v1146
      %v1148 = vpop.xlane.xlu0 %1147
      %v1149 = vadd.f32 %v637, %v638
      %1150 = vadd.xlane.f32.xlu0 %v1149
      %v1151 = vpop.xlane.xlu0 %1150
      %v1152 = vadd.f32 %v639, %v640
      %1153 = vadd.xlane.f32.xlu0 %v1152
      %v1154 = vpop.xlane.xlu0 %1153
      %v1155 = vadd.f32 %v641, %v642
      %1156 = vadd.xlane.f32.xlu0 %v1155
      %v1157 = vpop.xlane.xlu0 %1156
      %v1158 = vadd.f32 %v643, %v644
      %1159 = vadd.xlane.f32.xlu0 %v1158
      %v1160 = vpop.xlane.xlu0 %1159
      %v1161 = vld [vmem:[%s7] sm:$0xff]
      %v1162 = vld [vmem:[%s7 + $0x8] sm:$0xff]
      %v1163 = vmul.f32 %v1145, %v1161
      %v1164 = vmul.f32 %v1148, %v1162
      %v1165 = vsel %vm437, %v1163, 0.0
      %v1166 = vsel %vm437, %v1164, 0.0
      %v1167 = vadd.f32 %v1165, %v1166
      %v1168 = vrot.slane %v1167, 4
      %v1169 = vadd.f32 %v1167, %v1168
      %v1170 = vrot.slane %v1169, 2
      %v1171 = vadd.f32 %v1169, %v1170
      %v1172 = vrot.slane %v1171, 1
      %v1173 = vadd.f32 %v1171, %v1172
      %v1174 = vld [vmem:[%s8] sm:$0xff]
      %v1175 = vld [vmem:[%s8 + $0x8] sm:$0xff]
      %v1176 = vld [vmem:[%s8 + $0x10] sm:$0xff]
      %v1177 = vld [vmem:[%s8 + $0x18] sm:$0xff]
      %v1178 = vmul.f32 %v1151, %v1174
      %v1179 = vmul.f32 %v1154, %v1175
      %v1180 = vmul.f32 %v1157, %v1176
      %v1181 = vmul.f32 %v1160, %v1177
      %v1182 = vsel %vm437, %v1178, 0.0
      %v1183 = vsel %vm437, %v1179, 0.0
      %v1184 = vadd.f32 %v1182, %v1183
      %v1185 = vsel %vm437, %v1180, 0.0
      %v1186 = vadd.f32 %v1184, %v1185
      %v1187 = vsel %vm437, %v1181, 0.0
      %v1188 = vadd.f32 %v1186, %v1187
      %v1189 = vrot.slane %v1188, 4
      %v1190 = vadd.f32 %v1188, %v1189
      %v1191 = vrot.slane %v1190, 2
      %v1192 = vadd.f32 %v1190, %v1191
      %v1193 = vrot.slane %v1192, 1
      %v1194 = vadd.f32 %v1192, %v1193
      %v1195 = vadd.f32 %v1173, %v1194
      %v1196 = vld [vmem:[#allocation2] sm:$0x1]
      %v1197 = vadd.f32 %v1195, %v1196
      %1199 = vset.pattern.permute.xlu0 0
      %1200 = vperm.xlu0 %1199, %v1197
      %v1201 = vpop.permute.xlu0 %1200
      %1203 = vst [vmem:[%s357] sm:$0x1] %v1201
      %p1204 = scmp.lt.s32.totalorder %s23, 1
      %s1205 = scalar_select %p1204, %s23, 1
      %s1206 = scalar_lea.vmem %s10, %s1205
      // Predicated region
      $region61: #{cnn_model_forward.1} parent=59 // pred_check
        %p1207 = pneg %p256
      $region62: #{cnn_model_forward.1} parent=59 // pred_check_branch
        %1209 = sbr.rel (%p1207) target = $region64
      $region63: #{cnn_model_forward.1} parent=59 // pred_region
        _
      $region64: #{cnn_model_forward.1} parent=59 // pred_fallthru
        _
    $region60: #{cnn_model_forward.1} parent=5 // pred_fallthru
      _
    %p1210 = scmp.le.s32.totalorder 2, %s18
    // Predicated region
    $region65: #{cnn_model_forward.1} parent=5 // pred_check
      %p1211 = pneg %p1210
    $region66: #{cnn_model_forward.1} parent=5 // pred_check_branch
      %1213 = sbr.rel (%p1211) target = $region68
    $region67: #{cnn_model_forward.1} parent=5 // pred_region
      %s1214 = ssub.s32 %s18, 2
      // Predicated region
      $region69: #{cnn_model_forward.1} parent=67 // pred_check
        %p1215 = pneg %p262
      $region70: #{cnn_model_forward.1} parent=67 // pred_check_branch
        %1217 = sbr.rel (%p1215) target = $region72
      $region71: #{cnn_model_forward.1} parent=67 // pred_region
        %p1218 = scmp.lt.s32.totalorder %s24, 1
        %s1219 = scalar_select %p1218, %s24, 1
        %s1220 = scalar_lea.vmem %s10, %s1219
      $region72: #{cnn_model_forward.1} parent=67 // pred_fallthru
        _
    $region68: #{cnn_model_forward.1} parent=5 // pred_fallthru
      _
  $region6: #{cnn_model_forward.1} parent=0 // loop_footer
    %s22 = sadd.s32 1, %s18
  $region7: #{cnn_model_forward.1} parent=0 // loop_footer_branch
    %17 = sbr.rel target = $region3
  $region8: #{cnn_model_forward.1} parent=0 // loop_exit
    _

</llo_original>
